<compile_context>
chip_gen: v5e
topology: v5e:2x2
jax: 0.10.0
libtpu: 0.0.40
codegen_flags: <defaults>
</compile_context>

<pallas_src>
import functools

import jax
import jax.numpy as jnp
from jax.experimental import pallas as pl
from jax.experimental.pallas import tpu as pltpu


def neumf_kernel(x_mlp_ref, u_mf_ref, i_mf_ref,
                 w1_ref, b1_ref, w2_ref, b2_ref, w3_ref, b3_ref, w4_ref, b4_ref,
                 wa_mlp_ref, wa_mf_ref, ba_ref,
                 out_ref, *, norm_min, norm_range):
    """One TILE_B-row batch tile of the NeuMF forward pass."""

    def dense(x, w_ref, b_ref):
        # bf16 MXU inputs, f32 accumulation, f32 bias add.
        return jnp.dot(x.astype(jnp.bfloat16), w_ref[...],
                       preferred_element_type=jnp.float32) + b_ref[...]

    # --- MLP tower: (Linear -> ReLU) x 4 ; Dropout (MLP[8]) is identity. ----
    h = jnp.maximum(dense(x_mlp_ref[...], w1_ref, b1_ref), 0.0)
    h = jnp.maximum(dense(h, w2_ref, b2_ref), 0.0)
    h = jnp.maximum(dense(h, w3_ref, b3_ref), 0.0)
    h = jnp.maximum(dense(h, w4_ref, b4_ref), 0.0)

    # --- GMF tower: elementwise product of the MF embeddings. ---------------
    x_mf = u_mf_ref[...] * i_mf_ref[...]

    # --- Affine head over concat([x_mlp_out, x_mf], -1) as split matmul. ----
    logits = (jnp.dot(h.astype(jnp.bfloat16), wa_mlp_ref[...],
                      preferred_element_type=jnp.float32)
              + jnp.dot(x_mf, wa_mf_ref[...],
                        preferred_element_type=jnp.float32)
              + ba_ref[...])

    # Sigmoid: exp and the approximate reciprocal both run on the EUP slot.
    out = pl.reciprocal(1.0 + jnp.exp(-logits), approx=True)
    out_ref[...] = out * norm_range + norm_min


def neumf_forward(user_idx, item_idx, params, *,
                  norm_min=1.0, norm_range=5.0, tile_b=128):
    f32, bf16 = jnp.float32, jnp.bfloat16

    # Embedding gathers (glue).  Tables cast to bf16 first so the gathered
    # rows the kernel re-reads from HBM are half the size.
    # TODO(synk): fuse the gather into the kernel via scalar-prefetched indices.
    u_mlp = params["emb_user_mlp"].astype(bf16)[user_idx]
    i_mlp = params["emb_item_mlp"].astype(bf16)[item_idx]
    u_mf = params["emb_user_mf"].astype(bf16)[user_idx]
    i_mf = params["emb_item_mf"].astype(bf16)[item_idx]

    # Layer-1 concat done once in the wrapper (w1 is already stored
    # concatenated), so the kernel runs one K = 2*d_mlp matmul.
    x_mlp = jnp.concatenate([u_mlp, i_mlp], axis=-1)

    d_mlp, d_mf = u_mlp.shape[-1], u_mf.shape[-1]
    h1, h2, h3, h4 = (params["w1"].shape[-1], params["w2"].shape[-1],
                      params["w3"].shape[-1], params["w4"].shape[-1])

    # Weights in bf16 (MXU-native); biases stay f32.
    w1 = params["w1"].astype(bf16)
    w2 = params["w2"].astype(bf16)
    w3 = params["w3"].astype(bf16)
    w4 = params["w4"].astype(bf16)
    wa_mlp = params["wa"][:h4].astype(bf16)
    wa_mf = params["wa"][h4:].astype(bf16)
    b1 = params["b1"].astype(f32)
    b2 = params["b2"].astype(f32)
    b3 = params["b3"].astype(f32)
    b4 = params["b4"].astype(f32)
    ba = params["ba"].astype(f32)

    # Pad batch up to a multiple of the tile so the grid is exact.
    batch = x_mlp.shape[0]
    num_tiles = pl.cdiv(batch, tile_b)
    padded = num_tiles * tile_b
    pad = padded - batch
    if pad:
        x_mlp = jnp.pad(x_mlp, ((0, pad), (0, 0)))
        u_mf = jnp.pad(u_mf, ((0, pad), (0, 0)))
        i_mf = jnp.pad(i_mf, ((0, pad), (0, 0)))

    # Batch-tiled operands: block index follows the grid step (pipelined).
    def tiled(feat):
        return pl.BlockSpec((tile_b, feat), lambda b: (b, 0))

    # Weights/biases: constant index_map -> DMA'd once, VMEM-resident across
    # all batch tiles (no per-tile re-fetch).
    def pinned(arr):
        return pl.BlockSpec(arr.shape, lambda b: (0, 0))

    weight_args = (w1, b1, w2, b2, w3, b3, w4, b4, wa_mlp, wa_mf, ba)
    in_specs = ([tiled(2 * d_mlp), tiled(d_mf), tiled(d_mf)]
                + [pinned(w) for w in weight_args])

    flops = 2 * padded * (2 * d_mlp * h1 + h1 * h2 + h2 * h3 + h3 * h4
                          + h4 + d_mf)
    bytes_accessed = (padded * (2 * d_mlp + 2 * d_mf) * 2      # bf16 embeddings
                      + padded * 4                              # f32 output
                      + sum(int(w.size) * w.dtype.itemsize for w in weight_args))
    cost = pl.CostEstimate(flops=flops, transcendentals=2 * padded,
                           bytes_accessed=bytes_accessed)

    kernel = functools.partial(neumf_kernel,
                               norm_min=float(norm_min),
                               norm_range=float(norm_range))
    out = pl.pallas_call(
        kernel,
        out_shape=jax.ShapeDtypeStruct((padded, 1), jnp.float32),
        grid=(num_tiles,),
        in_specs=in_specs,
        out_specs=pl.BlockSpec((tile_b, 1), lambda b: (b, 0)),
        compiler_params=pltpu.CompilerParams(
            dimension_semantics=("parallel",),
            vmem_limit_bytes=32 * 1024 * 1024),
        cost_estimate=cost,
    )(x_mlp, u_mf, i_mf, *weight_args)

    return out[:batch]


def neumf_ref(user_idx, item_idx, params, *, norm_min=1.0, norm_range=5.0):
    """Pure-JAX f32 reference (mirrors the PyTorch forward)."""
    u_mlp = params["emb_user_mlp"][user_idx]
    i_mlp = params["emb_item_mlp"][item_idx]
    u_mf = params["emb_user_mf"][user_idx]
    i_mf = params["emb_item_mf"][item_idx]

    x_mlp = jnp.concatenate([u_mlp, i_mlp], axis=-1)
    x_mf = u_mf * i_mf

    h = jnp.maximum(x_mlp @ params["w1"] + params["b1"], 0.0)
    h = jnp.maximum(h @ params["w2"] + params["b2"], 0.0)
    h = jnp.maximum(h @ params["w3"] + params["b3"], 0.0)
    h = jnp.maximum(h @ params["w4"] + params["b4"], 0.0)

    out = jnp.concatenate([h, x_mf], axis=-1) @ params["wa"] + params["ba"]
    out = 1.0 / (1.0 + jnp.exp(-out))
    return out * norm_range + norm_min


def make_params(key, *, num_users, num_items, d_mlp, d_mf, hidden):
    """Deterministic synthetic parameters; Linear weights stored (in, out)."""
    ks = jax.random.split(key, 16)
    h1, h2, h3, h4 = hidden

    def w(k, shape, scale=0.1):
        return (scale * jax.random.normal(k, shape)).astype(jnp.float32)

    params = {
        "emb_user_mlp": w(ks[0], (num_users, d_mlp)),
        "emb_item_mlp": w(ks[1], (num_items, d_mlp)),
        "emb_user_mf": w(ks[2], (num_users, d_mf)),
        "emb_item_mf": w(ks[3], (num_items, d_mf)),
        "w1": w(ks[4], (2 * d_mlp, h1)), "b1": w(ks[5], (1, h1)),
        "w2": w(ks[6], (h1, h2)),        "b2": w(ks[7], (1, h2)),
        "w3": w(ks[8], (h2, h3)),        "b3": w(ks[9], (1, h3)),
        "w4": w(ks[10], (h3, h4)),       "b4": w(ks[11], (1, h4)),
    }

    # Mirror NeuMF._load_pretrained(): affine head from MLP[9] (Linear(h4,1))
    # and the GMF output layer (Linear(d_mf,1)).
    mlp_final_w = w(ks[12], (h4, 1))
    mlp_final_b = w(ks[13], (1, 1))
    gmf_final_w = w(ks[14], (d_mf, 1))
    gmf_final_b = w(ks[15], (1, 1))
    params["wa"] = 0.5 * jnp.concatenate([mlp_final_w, gmf_final_w], axis=0)
    params["ba"] = 0.5 * mlp_final_b + gmf_final_b
    return params


if __name__ == "__main__":
    key = jax.random.PRNGKey(0)
    k_params, k_user, k_item = jax.random.split(key, 3)

    NUM_USERS, NUM_ITEMS = 64, 96
    D_MLP, D_MF = 16, 8
    HIDDEN = (32, 16, 8, 8)     # out_features of the 4 MLP Linear layers
    BATCH = 200                 # deliberately not a multiple of TILE_B
    TILE_B = 128
    NORM_MIN, NORM_RANGE = 1.0, 5.0   # output_range=(1,5): min=1, |5-1|+1=5

    params = make_params(k_params, num_users=NUM_USERS, num_items=NUM_ITEMS,
                         d_mlp=D_MLP, d_mf=D_MF, hidden=HIDDEN)
    user_idx = jax.random.randint(k_user, (BATCH,), 0, NUM_USERS)
    item_idx = jax.random.randint(k_item, (BATCH,), 0, NUM_ITEMS)

    fwd = jax.jit(functools.partial(neumf_forward, norm_min=NORM_MIN,
                                    norm_range=NORM_RANGE, tile_b=TILE_B))
    out = jax.block_until_ready(fwd(user_idx, item_idx, params))

    ref = neumf_ref(user_idx, item_idx, params,
                    norm_min=NORM_MIN, norm_range=NORM_RANGE)
    assert out.shape == (BATCH, 1), out.shape
    # Tolerance covers bf16 matmul inputs + the EUP approximate reciprocal
    # relative to the pure-f32 reference (outputs live in [1, 6]).
    max_err = float(jnp.max(jnp.abs(out - ref)))
    assert max_err < 5e-2, max_err
    print("KERNEL_OK")
</pallas_src>

<mosaic_0001>
module attributes {stable_mosaic.version = 11 : i64} {
  func.func @neumf_kernel(%arg0: i32, %arg1: memref<128x32xbf16, #tpu.memory_space<vmem>>, %arg2: memref<128x8xbf16, #tpu.memory_space<vmem>>, %arg3: memref<128x8xbf16, #tpu.memory_space<vmem>>, %arg4: memref<32x32xbf16, #tpu.memory_space<vmem>>, %arg5: memref<1x32xf32, #tpu.memory_space<vmem>>, %arg6: memref<32x16xbf16, #tpu.memory_space<vmem>>, %arg7: memref<1x16xf32, #tpu.memory_space<vmem>>, %arg8: memref<16x8xbf16, #tpu.memory_space<vmem>>, %arg9: memref<1x8xf32, #tpu.memory_space<vmem>>, %arg10: memref<8x8xbf16, #tpu.memory_space<vmem>>, %arg11: memref<1x8xf32, #tpu.memory_space<vmem>>, %arg12: memref<8x1xbf16, #tpu.memory_space<vmem>>, %arg13: memref<8x1xbf16, #tpu.memory_space<vmem>>, %arg14: memref<1x1xf32, #tpu.memory_space<vmem>>, %arg15: memref<128x1xf32, #tpu.memory_space<vmem>>) attributes {dimension_semantics = [#tpu.dimension_semantics<parallel>], iteration_bounds = array<i64: 2>, scalar_prefetch = 0 : i64, scratch_operands = 0 : i64, tpu.core_type = #tpu.core_type<tc>, window_params = [{transform_indices = @transform_0, window_bounds = array<i64: 128, 32>}, {transform_indices = @transform_1, window_bounds = array<i64: 128, 8>}, {transform_indices = @transform_2, window_bounds = array<i64: 128, 8>}, {pipeline_mode = #tpu.pipeline_mode<synchronous>, transform_indices = @transform_3, window_bounds = array<i64: 32, 32>}, {pipeline_mode = #tpu.pipeline_mode<synchronous>, transform_indices = @transform_4, window_bounds = array<i64: 1, 32>}, {pipeline_mode = #tpu.pipeline_mode<synchronous>, transform_indices = @transform_5, window_bounds = array<i64: 32, 16>}, {pipeline_mode = #tpu.pipeline_mode<synchronous>, transform_indices = @transform_6, window_bounds = array<i64: 1, 16>}, {pipeline_mode = #tpu.pipeline_mode<synchronous>, transform_indices = @transform_7, window_bounds = array<i64: 16, 8>}, {pipeline_mode = #tpu.pipeline_mode<synchronous>, transform_indices = @transform_8, window_bounds = array<i64: 1, 8>}, {pipeline_mode = #tpu.pipeline_mode<synchronous>, transform_indices = @transform_9, window_bounds = array<i64: 8, 8>}, {pipeline_mode = #tpu.pipeline_mode<synchronous>, transform_indices = @transform_10, window_bounds = array<i64: 1, 8>}, {pipeline_mode = #tpu.pipeline_mode<synchronous>, transform_indices = @transform_11, window_bounds = array<i64: 8, 1>}, {pipeline_mode = #tpu.pipeline_mode<synchronous>, transform_indices = @transform_12, window_bounds = array<i64: 8, 1>}, {pipeline_mode = #tpu.pipeline_mode<synchronous>, transform_indices = @transform_13, window_bounds = array<i64: 1, 1>}, {transform_indices = @transform_14, window_bounds = array<i64: 128, 1>}]} {
    %c0 = arith.constant 0 : index
    %c0_0 = arith.constant 0 : index
    %0 = vector.load %arg1[%c0, %c0_0] : memref<128x32xbf16, #tpu.memory_space<vmem>>, vector<128x32xbf16>
    %c0_1 = arith.constant 0 : index
    %c0_2 = arith.constant 0 : index
    %1 = vector.load %arg4[%c0_1, %c0_2] : memref<32x32xbf16, #tpu.memory_space<vmem>>, vector<32x32xbf16>
    %cst = arith.constant dense<0.000000e+00> : vector<128x32xf32>
    %2 = tpu.matmul %0, %1, %cst {dimension_numbers = #tpu.dot_dimension_numbers<[1], [0], [0], [1], [0, 0, 1, 1], [], []>} : vector<128x32xbf16>, vector<32x32xbf16>, vector<128x32xf32> -> vector<128x32xf32>
    %c0_3 = arith.constant 0 : index
    %c0_4 = arith.constant 0 : index
    %3 = vector.load %arg5[%c0_3, %c0_4] : memref<1x32xf32, #tpu.memory_space<vmem>>, vector<1x32xf32>
    %4 = vector.broadcast %3 : vector<1x32xf32> to vector<128x32xf32>
    %5 = arith.addf %2, %4 : vector<128x32xf32>
    %cst_5 = arith.constant 0.000000e+00 : f32
    %6 = vector.broadcast %cst_5 : f32 to vector<128x32xf32>
    %7 = arith.maximumf %5, %6 : vector<128x32xf32>
    %8 = arith.truncf %7 : vector<128x32xf32> to vector<128x32xbf16>
    %c0_6 = arith.constant 0 : index
    %c0_7 = arith.constant 0 : index
    %9 = vector.load %arg6[%c0_6, %c0_7] : memref<32x16xbf16, #tpu.memory_space<vmem>>, vector<32x16xbf16>
    %cst_8 = arith.constant dense<0.000000e+00> : vector<128x16xf32>
    %10 = tpu.matmul %8, %9, %cst_8 {dimension_numbers = #tpu.dot_dimension_numbers<[1], [0], [0], [1], [0, 0, 1, 1], [], []>} : vector<128x32xbf16>, vector<32x16xbf16>, vector<128x16xf32> -> vector<128x16xf32>
    %c0_9 = arith.constant 0 : index
    %c0_10 = arith.constant 0 : index
    %11 = vector.load %arg7[%c0_9, %c0_10] : memref<1x16xf32, #tpu.memory_space<vmem>>, vector<1x16xf32>
    %12 = vector.broadcast %11 : vector<1x16xf32> to vector<128x16xf32>
    %13 = arith.addf %10, %12 : vector<128x16xf32>
    %cst_11 = arith.constant 0.000000e+00 : f32
    %14 = vector.broadcast %cst_11 : f32 to vector<128x16xf32>
    %15 = arith.maximumf %13, %14 : vector<128x16xf32>
    %16 = arith.truncf %15 : vector<128x16xf32> to vector<128x16xbf16>
    %c0_12 = arith.constant 0 : index
    %c0_13 = arith.constant 0 : index
    %17 = vector.load %arg8[%c0_12, %c0_13] : memref<16x8xbf16, #tpu.memory_space<vmem>>, vector<16x8xbf16>
    %cst_14 = arith.constant dense<0.000000e+00> : vector<128x8xf32>
    %18 = tpu.matmul %16, %17, %cst_14 {dimension_numbers = #tpu.dot_dimension_numbers<[1], [0], [0], [1], [0, 0, 1, 1], [], []>} : vector<128x16xbf16>, vector<16x8xbf16>, vector<128x8xf32> -> vector<128x8xf32>
    %c0_15 = arith.constant 0 : index
    %c0_16 = arith.constant 0 : index
    %19 = vector.load %arg9[%c0_15, %c0_16] : memref<1x8xf32, #tpu.memory_space<vmem>>, vector<1x8xf32>
    %20 = vector.broadcast %19 : vector<1x8xf32> to vector<128x8xf32>
    %21 = arith.addf %18, %20 : vector<128x8xf32>
    %cst_17 = arith.constant 0.000000e+00 : f32
    %22 = vector.broadcast %cst_17 : f32 to vector<128x8xf32>
    %23 = arith.maximumf %21, %22 : vector<128x8xf32>
    %24 = arith.truncf %23 : vector<128x8xf32> to vector<128x8xbf16>
    %c0_18 = arith.constant 0 : index
    %c0_19 = arith.constant 0 : index
    %25 = vector.load %arg10[%c0_18, %c0_19] : memref<8x8xbf16, #tpu.memory_space<vmem>>, vector<8x8xbf16>
    %cst_20 = arith.constant dense<0.000000e+00> : vector<128x8xf32>
    %26 = tpu.matmul %24, %25, %cst_20 {dimension_numbers = #tpu.dot_dimension_numbers<[1], [0], [0], [1], [0, 0, 1, 1], [], []>} : vector<128x8xbf16>, vector<8x8xbf16>, vector<128x8xf32> -> vector<128x8xf32>
    %c0_21 = arith.constant 0 : index
    %c0_22 = arith.constant 0 : index
    %27 = vector.load %arg11[%c0_21, %c0_22] : memref<1x8xf32, #tpu.memory_space<vmem>>, vector<1x8xf32>
    %28 = vector.broadcast %27 : vector<1x8xf32> to vector<128x8xf32>
    %29 = arith.addf %26, %28 : vector<128x8xf32>
    %cst_23 = arith.constant 0.000000e+00 : f32
    %30 = vector.broadcast %cst_23 : f32 to vector<128x8xf32>
    %31 = arith.maximumf %29, %30 : vector<128x8xf32>
    %c0_24 = arith.constant 0 : index
    %c0_25 = arith.constant 0 : index
    %32 = vector.load %arg2[%c0_24, %c0_25] : memref<128x8xbf16, #tpu.memory_space<vmem>>, vector<128x8xbf16>
    %c0_26 = arith.constant 0 : index
    %c0_27 = arith.constant 0 : index
    %33 = vector.load %arg3[%c0_26, %c0_27] : memref<128x8xbf16, #tpu.memory_space<vmem>>, vector<128x8xbf16>
    %34 = arith.mulf %32, %33 : vector<128x8xbf16>
    %35 = arith.truncf %31 : vector<128x8xf32> to vector<128x8xbf16>
    %c0_28 = arith.constant 0 : index
    %c0_29 = arith.constant 0 : index
    %36 = vector.load %arg12[%c0_28, %c0_29] : memref<8x1xbf16, #tpu.memory_space<vmem>>, vector<8x1xbf16>
    %cst_30 = arith.constant dense<0.000000e+00> : vector<128x1xf32>
    %37 = tpu.matmul %35, %36, %cst_30 {dimension_numbers = #tpu.dot_dimension_numbers<[1], [0], [0], [1], [0, 0, 1, 1], [], []>} : vector<128x8xbf16>, vector<8x1xbf16>, vector<128x1xf32> -> vector<128x1xf32>
    %c0_31 = arith.constant 0 : index
    %c0_32 = arith.constant 0 : index
    %38 = vector.load %arg13[%c0_31, %c0_32] : memref<8x1xbf16, #tpu.memory_space<vmem>>, vector<8x1xbf16>
    %cst_33 = arith.constant dense<0.000000e+00> : vector<128x1xf32>
    %39 = tpu.matmul %34, %38, %cst_33 {dimension_numbers = #tpu.dot_dimension_numbers<[1], [0], [0], [1], [0, 0, 1, 1], [], []>} : vector<128x8xbf16>, vector<8x1xbf16>, vector<128x1xf32> -> vector<128x1xf32>
    %40 = arith.addf %37, %39 : vector<128x1xf32>
    %c0_34 = arith.constant 0 : index
    %c0_35 = arith.constant 0 : index
    %41 = vector.load %arg14[%c0_34, %c0_35] : memref<1x1xf32, #tpu.memory_space<vmem>>, vector<1x1xf32>
    %42 = vector.broadcast %41 : vector<1x1xf32> to vector<128x1xf32>
    %43 = arith.addf %40, %42 : vector<128x1xf32>
    %cst_36 = arith.constant 0.000000e+00 : f32
    %44 = vector.broadcast %cst_36 : f32 to vector<128x1xf32>
    %45 = arith.subf %44, %43 : vector<128x1xf32>
    %46 = math.exp %45 : vector<128x1xf32>
    %cst_37 = arith.constant 1.000000e+00 : f32
    %47 = vector.broadcast %cst_37 : f32 to vector<128x1xf32>
    %48 = arith.addf %47, %46 : vector<128x1xf32>
    %49 = tpu.reciprocal %48 {approx = true} : vector<128x1xf32> -> vector<128x1xf32>
    %cst_38 = arith.constant 5.000000e+00 : f32
    %50 = vector.broadcast %cst_38 : f32 to vector<128x1xf32>
    %51 = arith.mulf %49, %50 : vector<128x1xf32>
    %cst_39 = arith.constant 1.000000e+00 : f32
    %52 = vector.broadcast %cst_39 : f32 to vector<128x1xf32>
    %53 = arith.addf %51, %52 : vector<128x1xf32>
    %c0_40 = arith.constant 0 : index
    %c0_41 = arith.constant 0 : index
    %54 = vector.load %arg15[%c0_40, %c0_41] : memref<128x1xf32, #tpu.memory_space<vmem>>, vector<128x1xf32>
    tpu.vector_store %arg15[%c0_40, %c0_41], %53 {strides = array<i32>} : memref<128x1xf32, #tpu.memory_space<vmem>>, vector<128x1xf32>,
    return
  }
  func.func @transform_0(%arg0: i32) -> (i32, i32) {
    %c0_i32 = arith.constant 0 : i32
    %c0_i32_0 = arith.constant 0 : i32
    return %arg0, %c0_i32 : i32, i32
  }
  func.func @transform_1(%arg0: i32) -> (i32, i32) {
    %c0_i32 = arith.constant 0 : i32
    %c0_i32_0 = arith.constant 0 : i32
    return %arg0, %c0_i32 : i32, i32
  }
  func.func @transform_2(%arg0: i32) -> (i32, i32) {
    %c0_i32 = arith.constant 0 : i32
    %c0_i32_0 = arith.constant 0 : i32
    return %arg0, %c0_i32 : i32, i32
  }
  func.func @transform_3(%arg0: i32) -> (i32, i32) {
    %c0_i32 = arith.constant 0 : i32
    %c0_i32_0 = arith.constant 0 : i32
    %c0_i32_1 = arith.constant 0 : i32
    return %c0_i32, %c0_i32_0 : i32, i32
  }
  func.func @transform_4(%arg0: i32) -> (i32, i32) {
    %c0_i32 = arith.constant 0 : i32
    %c0_i32_0 = arith.constant 0 : i32
    %c0_i32_1 = arith.constant 0 : i32
    return %c0_i32, %c0_i32_0 : i32, i32
  }
  func.func @transform_5(%arg0: i32) -> (i32, i32) {
    %c0_i32 = arith.constant 0 : i32
    %c0_i32_0 = arith.constant 0 : i32
    %c0_i32_1 = arith.constant 0 : i32
    return %c0_i32, %c0_i32_0 : i32, i32
  }
  func.func @transform_6(%arg0: i32) -> (i32, i32) {
    %c0_i32 = arith.constant 0 : i32
    %c0_i32_0 = arith.constant 0 : i32
    %c0_i32_1 = arith.constant 0 : i32
    return %c0_i32, %c0_i32_0 : i32, i32
  }
  func.func @transform_7(%arg0: i32) -> (i32, i32) {
    %c0_i32 = arith.constant 0 : i32
    %c0_i32_0 = arith.constant 0 : i32
    %c0_i32_1 = arith.constant 0 : i32
    return %c0_i32, %c0_i32_0 : i32, i32
  }
  func.func @transform_8(%arg0: i32) -> (i32, i32) {
    %c0_i32 = arith.constant 0 : i32
    %c0_i32_0 = arith.constant 0 : i32
    %c0_i32_1 = arith.constant 0 : i32
    return %c0_i32, %c0_i32_0 : i32, i32
  }
  func.func @transform_9(%arg0: i32) -> (i32, i32) {
    %c0_i32 = arith.constant 0 : i32
    %c0_i32_0 = arith.constant 0 : i32
    %c0_i32_1 = arith.constant 0 : i32
    return %c0_i32, %c0_i32_0 : i32, i32
  }
  func.func @transform_10(%arg0: i32) -> (i32, i32) {
    %c0_i32 = arith.constant 0 : i32
    %c0_i32_0 = arith.constant 0 : i32
    %c0_i32_1 = arith.constant 0 : i32
    return %c0_i32, %c0_i32_0 : i32, i32
  }
  func.func @transform_11(%arg0: i32) -> (i32, i32) {
    %c0_i32 = arith.constant 0 : i32
    %c0_i32_0 = arith.constant 0 : i32
    %c0_i32_1 = arith.constant 0 : i32
    return %c0_i32, %c0_i32_0 : i32, i32
  }
  func.func @transform_12(%arg0: i32) -> (i32, i32) {
    %c0_i32 = arith.constant 0 : i32
    %c0_i32_0 = arith.constant 0 : i32
    %c0_i32_1 = arith.constant 0 : i32
    return %c0_i32, %c0_i32_0 : i32, i32
  }
  func.func @transform_13(%arg0: i32) -> (i32, i32) {
    %c0_i32 = arith.constant 0 : i32
    %c0_i32_0 = arith.constant 0 : i32
    %c0_i32_1 = arith.constant 0 : i32
    return %c0_i32, %c0_i32_0 : i32, i32
  }
  func.func @transform_14(%arg0: i32) -> (i32, i32) {
    %c0_i32 = arith.constant 0 : i32
    %c0_i32_0 = arith.constant 0 : i32
    return %arg0, %c0_i32 : i32, i32
  }
}

</mosaic_0001>

<llo_original>
// kernel: neumf_forward.1
$region0: #{neumf_forward.1}
  #allocation0 [shape = 'u32[]', space=smem, size = 0x4, offset = 0x4, fixed_abs, tag = 'smem constant byte address 0x4 - core index']
  #allocation1 [shape = 'u32[72,128]{1,0:T(1,128)}', space=vmem, size = 0x9000, scoped, tag = 'internal scratch']
  #allocation2 [shape = 'f32[1,1]{1,0:T(1,128)S(1)}', space=vmem, size = 0x200, scoped, tag = 'scoped memory for neumf_forward.1']
  %s0 = inlined_call_operand.vmem [shape: bf16[256,32], index: 0, kind: input, shape index: {}]
  %s1 = inlined_call_operand.vmem [shape: bf16[256,8], index: 1, kind: input, shape index: {}]
  %s2 = inlined_call_operand.vmem [shape: bf16[256,8], index: 2, kind: input, shape index: {}]
  %s3 = inlined_call_operand.vmem [shape: bf16[32,32], index: 3, kind: input, shape index: {}]
  %s4 = inlined_call_operand.vmem [shape: f32[1,32], index: 4, kind: input, shape index: {}]
  %s5 = inlined_call_operand.vmem [shape: bf16[32,16], index: 5, kind: input, shape index: {}]
  %s6 = inlined_call_operand.vmem [shape: f32[1,16], index: 6, kind: input, shape index: {}]
  %s7 = inlined_call_operand.vmem [shape: bf16[16,8], index: 7, kind: input, shape index: {}]
  %s8 = inlined_call_operand.vmem [shape: f32[1,8], index: 8, kind: input, shape index: {}]
  %s9 = inlined_call_operand.vmem [shape: bf16[8,8], index: 9, kind: input, shape index: {}]
  %s10 = inlined_call_operand.vmem [shape: f32[1,8], index: 10, kind: input, shape index: {}]
  %s11 = inlined_call_operand.vmem [shape: bf16[8,1], index: 11, kind: input, shape index: {}]
  %s12 = inlined_call_operand.vmem [shape: bf16[8,1], index: 12, kind: input, shape index: {}]
  %s13 = inlined_call_operand.<no memory space> [shape: f32[1,1], index: 13, kind: input, shape index: {}]
  %s14 = inlined_call_operand.vmem [shape: f32[256,1], index: 14, kind: output, shape index: {}]
  %s15 = sld [smem:[#allocation0]]
  $region89: #{neumf_forward.1} parent=0
    _
  %s17 = ssub.s32 1, %s15
  %s18 = scalar_select 0, %s17, %s15
  %v19 = vstv %s13
  %20 = vst [vmem:[#allocation2] sm:$0x1] %v19
  loop: start=0, step=1, limit=4
  $region2: #{neumf_forward.1} parent=0 // loop_pre_header
    _
  $region3: #{neumf_forward.1} parent=0 // loop_header
    %s22 = sphi 0, %s26
    %p23 = scmp.ge.s32.totalorder %s22, 4
    %s32 = sphi 0, %s34
    %s35 = sphi 0, %s32
    %s36 = sphi 0, %s35
    %s52 = sphi 0, %s36
    %s58 = sphi 0, %s60
    %s61 = sphi 0, %s58
    %s62 = sphi 0, %s61
    %s78 = sphi 0, %s62
    %s84 = sphi 0, %s86
    %s87 = sphi 0, %s84
    %s88 = sphi 0, %s87
    %s104 = sphi 0, %s88
    %s108 = sphi 0, %s108
    %s110 = sphi 0, %s108
    %s111 = sphi 0, %s110
    %s125 = sphi 0, %s111
    %s129 = sphi 0, %s129
    %s131 = sphi 0, %s129
    %s132 = sphi 0, %s131
    %s146 = sphi 0, %s132
    %s150 = sphi 0, %s150
    %s152 = sphi 0, %s150
    %s153 = sphi 0, %s152
    %s167 = sphi 0, %s153
    %s171 = sphi 0, %s171
    %s173 = sphi 0, %s171
    %s174 = sphi 0, %s173
    %s188 = sphi 0, %s174
    %s192 = sphi 0, %s192
    %s194 = sphi 0, %s192
    %s195 = sphi 0, %s194
    %s209 = sphi 0, %s195
    %s213 = sphi 0, %s213
    %s215 = sphi 0, %s213
    %s216 = sphi 0, %s215
    %s230 = sphi 0, %s216
    %s234 = sphi 0, %s234
    %s236 = sphi 0, %s234
    %s237 = sphi 0, %s236
    %s251 = sphi 0, %s237
    %s255 = sphi 0, %s255
    %s257 = sphi 0, %s255
    %s258 = sphi 0, %s257
    %s272 = sphi 0, %s258
    %s276 = sphi 0, %s276
    %s278 = sphi 0, %s276
    %s279 = sphi 0, %s278
    %s293 = sphi 0, %s279
    %s297 = sphi 0, %s297
    %s299 = sphi 0, %s297
    %s300 = sphi 0, %s299
    %s314 = sphi 0, %s300
    %s318 = sphi 0, %s318
    %s320 = sphi 0, %s318
    %s321 = sphi 0, %s320
    %s335 = sphi 0, %s321
    %s341 = sphi 0, %s343
    %s344 = sphi 0, %s341
    %s345 = sphi 0, %s344
    %s361 = sphi 0, %s345
  $region4: #{neumf_forward.1} parent=0 // loop_header_branch
    %25 = sbr.rel (%p23) target = $region8
  $region5: #{neumf_forward.1} parent=0 // loop_body
    %s27 = ssub.s32 %s22, 1
    %s28 = ssub.s32 %s22, 2
    %s29 = sadd.s32 %s22, 1
    %s30 = ssub.s32 %s22, %s29
    %p31 = scmp.eq.s32.totalorder %s30, 0
    %s33 = sadd.s32 %s32, 1
    %s34 = scalar_select %p31, %s32, %s33
    %p37 = pneg %p31
    %p38 = scmp.eq.s32.totalorder %s22, 1
    %p39 = por %p37, %p38
    %p40 = scmp.ne.s32.totalorder %s32, %s35
    %p41 = scmp.eq.s32.totalorder %s22, 0
    %p42 = por %p40, %p41
    %p43 = scmp.ne.s32.totalorder %s32, %s35
    %p44 = scmp.eq.s32.totalorder %s27, 1
    %p45 = por %p43, %p44
    %p46 = scmp.ne.s32.totalorder %s35, %s36
    %p47 = scmp.eq.s32.totalorder %s27, 0
    %p48 = por %p46, %p47
    %p49 = scmp.ne.s32.totalorder %s35, %s36
    %p50 = scmp.eq.s32.totalorder %s28, 1
    %p51 = por %p49, %p50
    %p53 = scmp.ne.s32.totalorder %s36, %s52
    %p54 = scmp.eq.s32.totalorder %s28, 0
    %p55 = por %p53, %p54
    %s56 = ssub.s32 %s22, %s29
    %p57 = scmp.eq.s32.totalorder %s56, 0
    %s59 = sadd.s32 %s58, 1
    %s60 = scalar_select %p57, %s58, %s59
    %p63 = pneg %p57
    %p64 = scmp.eq.s32.totalorder %s22, 1
    %p65 = por %p63, %p64
    %p66 = scmp.ne.s32.totalorder %s58, %s61
    %p67 = scmp.eq.s32.totalorder %s22, 0
    %p68 = por %p66, %p67
    %p69 = scmp.ne.s32.totalorder %s58, %s61
    %p70 = scmp.eq.s32.totalorder %s27, 1
    %p71 = por %p69, %p70
    %p72 = scmp.ne.s32.totalorder %s61, %s62
    %p73 = scmp.eq.s32.totalorder %s27, 0
    %p74 = por %p72, %p73
    %p75 = scmp.ne.s32.totalorder %s61, %s62
    %p76 = scmp.eq.s32.totalorder %s28, 1
    %p77 = por %p75, %p76
    %p79 = scmp.ne.s32.totalorder %s62, %s78
    %p80 = scmp.eq.s32.totalorder %s28, 0
    %p81 = por %p79, %p80
    %s82 = ssub.s32 %s22, %s29
    %p83 = scmp.eq.s32.totalorder %s82, 0
    %s85 = sadd.s32 %s84, 1
    %s86 = scalar_select %p83, %s84, %s85
    %p89 = pneg %p83
    %p90 = scmp.eq.s32.totalorder %s22, 1
    %p91 = por %p89, %p90
    %p92 = scmp.ne.s32.totalorder %s84, %s87
    %p93 = scmp.eq.s32.totalorder %s22, 0
    %p94 = por %p92, %p93
    %p95 = scmp.ne.s32.totalorder %s84, %s87
    %p96 = scmp.eq.s32.totalorder %s27, 1
    %p97 = por %p95, %p96
    %p98 = scmp.ne.s32.totalorder %s87, %s88
    %p99 = scmp.eq.s32.totalorder %s27, 0
    %p100 = por %p98, %p99
    %p101 = scmp.ne.s32.totalorder %s87, %s88
    %p102 = scmp.eq.s32.totalorder %s28, 1
    %p103 = por %p101, %p102
    %p105 = scmp.ne.s32.totalorder %s88, %s104
    %p106 = scmp.eq.s32.totalorder %s28, 0
    %p107 = por %p105, %p106
    %s109 = sadd.s32 %s108, 1
    %p112 = scmp.eq.s32.totalorder %s22, 1
    %p113 = scmp.ne.s32.totalorder %s108, %s110
    %p114 = scmp.eq.s32.totalorder %s22, 0
    %p115 = por %p113, %p114
    %p116 = scmp.ne.s32.totalorder %s108, %s110
    %p117 = scmp.eq.s32.totalorder %s27, 1
    %p118 = por %p116, %p117
    %p119 = scmp.ne.s32.totalorder %s110, %s111
    %p120 = scmp.eq.s32.totalorder %s27, 0
    %p121 = por %p119, %p120
    %p122 = scmp.ne.s32.totalorder %s110, %s111
    %p123 = scmp.eq.s32.totalorder %s28, 1
    %p124 = por %p122, %p123
    %p126 = scmp.ne.s32.totalorder %s111, %s125
    %p127 = scmp.eq.s32.totalorder %s28, 0
    %p128 = por %p126, %p127
    %s130 = sadd.s32 %s129, 1
    %p133 = scmp.eq.s32.totalorder %s22, 1
    %p134 = scmp.ne.s32.totalorder %s129, %s131
    %p135 = scmp.eq.s32.totalorder %s22, 0
    %p136 = por %p134, %p135
    %p137 = scmp.ne.s32.totalorder %s129, %s131
    %p138 = scmp.eq.s32.totalorder %s27, 1
    %p139 = por %p137, %p138
    %p140 = scmp.ne.s32.totalorder %s131, %s132
    %p141 = scmp.eq.s32.totalorder %s27, 0
    %p142 = por %p140, %p141
    %p143 = scmp.ne.s32.totalorder %s131, %s132
    %p144 = scmp.eq.s32.totalorder %s28, 1
    %p145 = por %p143, %p144
    %p147 = scmp.ne.s32.totalorder %s132, %s146
    %p148 = scmp.eq.s32.totalorder %s28, 0
    %p149 = por %p147, %p148
    %s151 = sadd.s32 %s150, 1
    %p154 = scmp.eq.s32.totalorder %s22, 1
    %p155 = scmp.ne.s32.totalorder %s150, %s152
    %p156 = scmp.eq.s32.totalorder %s22, 0
    %p157 = por %p155, %p156
    %p158 = scmp.ne.s32.totalorder %s150, %s152
    %p159 = scmp.eq.s32.totalorder %s27, 1
    %p160 = por %p158, %p159
    %p161 = scmp.ne.s32.totalorder %s152, %s153
    %p162 = scmp.eq.s32.totalorder %s27, 0
    %p163 = por %p161, %p162
    %p164 = scmp.ne.s32.totalorder %s152, %s153
    %p165 = scmp.eq.s32.totalorder %s28, 1
    %p166 = por %p164, %p165
    %p168 = scmp.ne.s32.totalorder %s153, %s167
    %p169 = scmp.eq.s32.totalorder %s28, 0
    %p170 = por %p168, %p169
    %s172 = sadd.s32 %s171, 1
    %p175 = scmp.eq.s32.totalorder %s22, 1
    %p176 = scmp.ne.s32.totalorder %s171, %s173
    %p177 = scmp.eq.s32.totalorder %s22, 0
    %p178 = por %p176, %p177
    %p179 = scmp.ne.s32.totalorder %s171, %s173
    %p180 = scmp.eq.s32.totalorder %s27, 1
    %p181 = por %p179, %p180
    %p182 = scmp.ne.s32.totalorder %s173, %s174
    %p183 = scmp.eq.s32.totalorder %s27, 0
    %p184 = por %p182, %p183
    %p185 = scmp.ne.s32.totalorder %s173, %s174
    %p186 = scmp.eq.s32.totalorder %s28, 1
    %p187 = por %p185, %p186
    %p189 = scmp.ne.s32.totalorder %s174, %s188
    %p190 = scmp.eq.s32.totalorder %s28, 0
    %p191 = por %p189, %p190
    %s193 = sadd.s32 %s192, 1
    %p196 = scmp.eq.s32.totalorder %s22, 1
    %p197 = scmp.ne.s32.totalorder %s192, %s194
    %p198 = scmp.eq.s32.totalorder %s22, 0
    %p199 = por %p197, %p198
    %p200 = scmp.ne.s32.totalorder %s192, %s194
    %p201 = scmp.eq.s32.totalorder %s27, 1
    %p202 = por %p200, %p201
    %p203 = scmp.ne.s32.totalorder %s194, %s195
    %p204 = scmp.eq.s32.totalorder %s27, 0
    %p205 = por %p203, %p204
    %p206 = scmp.ne.s32.totalorder %s194, %s195
    %p207 = scmp.eq.s32.totalorder %s28, 1
    %p208 = por %p206, %p207
    %p210 = scmp.ne.s32.totalorder %s195, %s209
    %p211 = scmp.eq.s32.totalorder %s28, 0
    %p212 = por %p210, %p211
    %s214 = sadd.s32 %s213, 1
    %p217 = scmp.eq.s32.totalorder %s22, 1
    %p218 = scmp.ne.s32.totalorder %s213, %s215
    %p219 = scmp.eq.s32.totalorder %s22, 0
    %p220 = por %p218, %p219
    %p221 = scmp.ne.s32.totalorder %s213, %s215
    %p222 = scmp.eq.s32.totalorder %s27, 1
    %p223 = por %p221, %p222
    %p224 = scmp.ne.s32.totalorder %s215, %s216
    %p225 = scmp.eq.s32.totalorder %s27, 0
    %p226 = por %p224, %p225
    %p227 = scmp.ne.s32.totalorder %s215, %s216
    %p228 = scmp.eq.s32.totalorder %s28, 1
    %p229 = por %p227, %p228
    %p231 = scmp.ne.s32.totalorder %s216, %s230
    %p232 = scmp.eq.s32.totalorder %s28, 0
    %p233 = por %p231, %p232
    %s235 = sadd.s32 %s234, 1
    %p238 = scmp.eq.s32.totalorder %s22, 1
    %p239 = scmp.ne.s32.totalorder %s234, %s236
    %p240 = scmp.eq.s32.totalorder %s22, 0
    %p241 = por %p239, %p240
    %p242 = scmp.ne.s32.totalorder %s234, %s236
    %p243 = scmp.eq.s32.totalorder %s27, 1
    %p244 = por %p242, %p243
    %p245 = scmp.ne.s32.totalorder %s236, %s237
    %p246 = scmp.eq.s32.totalorder %s27, 0
    %p247 = por %p245, %p246
    %p248 = scmp.ne.s32.totalorder %s236, %s237
    %p249 = scmp.eq.s32.totalorder %s28, 1
    %p250 = por %p248, %p249
    %p252 = scmp.ne.s32.totalorder %s237, %s251
    %p253 = scmp.eq.s32.totalorder %s28, 0
    %p254 = por %p252, %p253
    %s256 = sadd.s32 %s255, 1
    %p259 = scmp.eq.s32.totalorder %s22, 1
    %p260 = scmp.ne.s32.totalorder %s255, %s257
    %p261 = scmp.eq.s32.totalorder %s22, 0
    %p262 = por %p260, %p261
    %p263 = scmp.ne.s32.totalorder %s255, %s257
    %p264 = scmp.eq.s32.totalorder %s27, 1
    %p265 = por %p263, %p264
    %p266 = scmp.ne.s32.totalorder %s257, %s258
    %p267 = scmp.eq.s32.totalorder %s27, 0
    %p268 = por %p266, %p267
    %p269 = scmp.ne.s32.totalorder %s257, %s258
    %p270 = scmp.eq.s32.totalorder %s28, 1
    %p271 = por %p269, %p270
    %p273 = scmp.ne.s32.totalorder %s258, %s272
    %p274 = scmp.eq.s32.totalorder %s28, 0
    %p275 = por %p273, %p274
    %s277 = sadd.s32 %s276, 1
    %p280 = scmp.eq.s32.totalorder %s22, 1
    %p281 = scmp.ne.s32.totalorder %s276, %s278
    %p282 = scmp.eq.s32.totalorder %s22, 0
    %p283 = por %p281, %p282
    %p284 = scmp.ne.s32.totalorder %s276, %s278
    %p285 = scmp.eq.s32.totalorder %s27, 1
    %p286 = por %p284, %p285
    %p287 = scmp.ne.s32.totalorder %s278, %s279
    %p288 = scmp.eq.s32.totalorder %s27, 0
    %p289 = por %p287, %p288
    %p290 = scmp.ne.s32.totalorder %s278, %s279
    %p291 = scmp.eq.s32.totalorder %s28, 1
    %p292 = por %p290, %p291
    %p294 = scmp.ne.s32.totalorder %s279, %s293
    %p295 = scmp.eq.s32.totalorder %s28, 0
    %p296 = por %p294, %p295
    %s298 = sadd.s32 %s297, 1
    %p301 = scmp.eq.s32.totalorder %s22, 1
    %p302 = scmp.ne.s32.totalorder %s297, %s299
    %p303 = scmp.eq.s32.totalorder %s22, 0
    %p304 = por %p302, %p303
    %p305 = scmp.ne.s32.totalorder %s297, %s299
    %p306 = scmp.eq.s32.totalorder %s27, 1
    %p307 = por %p305, %p306
    %p308 = scmp.ne.s32.totalorder %s299, %s300
    %p309 = scmp.eq.s32.totalorder %s27, 0
    %p310 = por %p308, %p309
    %p311 = scmp.ne.s32.totalorder %s299, %s300
    %p312 = scmp.eq.s32.totalorder %s28, 1
    %p313 = por %p311, %p312
    %p315 = scmp.ne.s32.totalorder %s300, %s314
    %p316 = scmp.eq.s32.totalorder %s28, 0
    %p317 = por %p315, %p316
    %s319 = sadd.s32 %s318, 1
    %p322 = scmp.eq.s32.totalorder %s22, 1
    %p323 = scmp.ne.s32.totalorder %s318, %s320
    %p324 = scmp.eq.s32.totalorder %s22, 0
    %p325 = por %p323, %p324
    %p326 = scmp.ne.s32.totalorder %s318, %s320
    %p327 = scmp.eq.s32.totalorder %s27, 1
    %p328 = por %p326, %p327
    %p329 = scmp.ne.s32.totalorder %s320, %s321
    %p330 = scmp.eq.s32.totalorder %s27, 0
    %p331 = por %p329, %p330
    %p332 = scmp.ne.s32.totalorder %s320, %s321
    %p333 = scmp.eq.s32.totalorder %s28, 1
    %p334 = por %p332, %p333
    %p336 = scmp.ne.s32.totalorder %s321, %s335
    %p337 = scmp.eq.s32.totalorder %s28, 0
    %p338 = por %p336, %p337
    %s339 = ssub.s32 %s22, %s29
    %p340 = scmp.eq.s32.totalorder %s339, 0
    %s342 = sadd.s32 %s341, 1
    %s343 = scalar_select %p340, %s341, %s342
    %p346 = pneg %p340
    %p347 = scmp.eq.s32.totalorder %s22, 1
    %p348 = por %p346, %p347
    %p349 = scmp.ne.s32.totalorder %s341, %s344
    %p350 = scmp.eq.s32.totalorder %s22, 0
    %p351 = por %p349, %p350
    %p352 = scmp.ne.s32.totalorder %s341, %s344
    %p353 = scmp.eq.s32.totalorder %s27, 1
    %p354 = por %p352, %p353
    %p355 = scmp.ne.s32.totalorder %s344, %s345
    %p356 = scmp.eq.s32.totalorder %s27, 0
    %p357 = por %p355, %p356
    %p358 = scmp.ne.s32.totalorder %s344, %s345
    %p359 = scmp.eq.s32.totalorder %s28, 1
    %p360 = por %p358, %p359
    %p362 = scmp.ne.s32.totalorder %s345, %s361
    %p363 = scmp.eq.s32.totalorder %s28, 0
    %p364 = por %p362, %p363
    %p365 = scmp.le.s32.totalorder 1, %s22
    %p366 = scmp.lt.s32.totalorder %s22, 3
    %p367 = pnand %p365, %p366
    %p368 = pneg %p367
    // Predicated region
    $region9: #{neumf_forward.1} parent=5 // pred_check
      _
    $region10: #{neumf_forward.1} parent=5 // pred_check_branch
      %370 = sbr.rel (%p367) target = $region12
    $region11: #{neumf_forward.1} parent=5 // pred_region
      %s371 = ssub.s32 %s22, 1
      // Predicated region
      $region13: #{neumf_forward.1} parent=11 // pred_check
        %p372 = pneg %p121
      $region14: #{neumf_forward.1} parent=11 // pred_check_branch
        %374 = sbr.rel (%p372) target = $region16
      $region15: #{neumf_forward.1} parent=11 // pred_region
        _
      $region16: #{neumf_forward.1} parent=11 // pred_fallthru
        _
      // Predicated region
      $region17: #{neumf_forward.1} parent=11 // pred_check
        %p375 = pneg %p142
      $region18: #{neumf_forward.1} parent=11 // pred_check_branch
        %377 = sbr.rel (%p375) target = $region20
      $region19: #{neumf_forward.1} parent=11 // pred_region
        _
      $region20: #{neumf_forward.1} parent=11 // pred_fallthru
        _
      // Predicated region
      $region21: #{neumf_forward.1} parent=11 // pred_check
        %p378 = pneg %p163
      $region22: #{neumf_forward.1} parent=11 // pred_check_branch
        %380 = sbr.rel (%p378) target = $region24
      $region23: #{neumf_forward.1} parent=11 // pred_region
        _
      $region24: #{neumf_forward.1} parent=11 // pred_fallthru
        _
      // Predicated region
      $region25: #{neumf_forward.1} parent=11 // pred_check
        %p381 = pneg %p184
      $region26: #{neumf_forward.1} parent=11 // pred_check_branch
        %383 = sbr.rel (%p381) target = $region28
      $region27: #{neumf_forward.1} parent=11 // pred_region
        _
      $region28: #{neumf_forward.1} parent=11 // pred_fallthru
        _
      // Predicated region
      $region29: #{neumf_forward.1} parent=11 // pred_check
        %p384 = pneg %p205
      $region30: #{neumf_forward.1} parent=11 // pred_check_branch
        %386 = sbr.rel (%p384) target = $region32
      $region31: #{neumf_forward.1} parent=11 // pred_region
        _
      $region32: #{neumf_forward.1} parent=11 // pred_fallthru
        _
      // Predicated region
      $region33: #{neumf_forward.1} parent=11 // pred_check
        %p387 = pneg %p226
      $region34: #{neumf_forward.1} parent=11 // pred_check_branch
        %389 = sbr.rel (%p387) target = $region36
      $region35: #{neumf_forward.1} parent=11 // pred_region
        _
      $region36: #{neumf_forward.1} parent=11 // pred_fallthru
        _
      // Predicated region
      $region37: #{neumf_forward.1} parent=11 // pred_check
        %p390 = pneg %p247
      $region38: #{neumf_forward.1} parent=11 // pred_check_branch
        %392 = sbr.rel (%p390) target = $region40
      $region39: #{neumf_forward.1} parent=11 // pred_region
        _
      $region40: #{neumf_forward.1} parent=11 // pred_fallthru
        _
      // Predicated region
      $region41: #{neumf_forward.1} parent=11 // pred_check
        %p393 = pneg %p268
      $region42: #{neumf_forward.1} parent=11 // pred_check_branch
        %395 = sbr.rel (%p393) target = $region44
      $region43: #{neumf_forward.1} parent=11 // pred_region
        _
      $region44: #{neumf_forward.1} parent=11 // pred_fallthru
        _
      // Predicated region
      $region45: #{neumf_forward.1} parent=11 // pred_check
        %p396 = pneg %p289
      $region46: #{neumf_forward.1} parent=11 // pred_check_branch
        %398 = sbr.rel (%p396) target = $region48
      $region47: #{neumf_forward.1} parent=11 // pred_region
        _
      $region48: #{neumf_forward.1} parent=11 // pred_fallthru
        _
      // Predicated region
      $region49: #{neumf_forward.1} parent=11 // pred_check
        %p399 = pneg %p310
      $region50: #{neumf_forward.1} parent=11 // pred_check_branch
        %401 = sbr.rel (%p399) target = $region52
      $region51: #{neumf_forward.1} parent=11 // pred_region
        _
      $region52: #{neumf_forward.1} parent=11 // pred_fallthru
        _
      // Predicated region
      $region53: #{neumf_forward.1} parent=11 // pred_check
        %p402 = pneg %p331
      $region54: #{neumf_forward.1} parent=11 // pred_check_branch
        %404 = sbr.rel (%p402) target = $region56
      $region55: #{neumf_forward.1} parent=11 // pred_region
        _
      $region56: #{neumf_forward.1} parent=11 // pred_fallthru
        _
    $region12: #{neumf_forward.1} parent=5 // pred_fallthru
      _
    %p405 = scmp.lt.s32.totalorder %s22, 2
    // Predicated region
    $region57: #{neumf_forward.1} parent=5 // pred_check
      %p406 = pneg %p405
    $region58: #{neumf_forward.1} parent=5 // pred_check_branch
      %408 = sbr.rel (%p406) target = $region60
    $region59: #{neumf_forward.1} parent=5 // pred_region
      // Predicated region
      $region61: #{neumf_forward.1} parent=59 // pred_check
        %p409 = pneg %p42
      $region62: #{neumf_forward.1} parent=59 // pred_check_branch
        %411 = sbr.rel (%p409) target = $region64
      $region63: #{neumf_forward.1} parent=59 // pred_region
        %s412 = smul.u32 16, %s22
        %p413 = scmp.lt.s32.totalorder %s412, 31
        %s414 = scalar_select %p413, %s412, 31
        %s415 = smul.addr %s414, 4
        %s416 = scalar_lea.vmem %s0, %s415
        %s417 = smul.u32 16, %s22
      $region64: #{neumf_forward.1} parent=59 // pred_fallthru
        _
      // Predicated region
      $region65: #{neumf_forward.1} parent=59 // pred_check
        %p418 = pneg %p68
      $region66: #{neumf_forward.1} parent=59 // pred_check_branch
        %420 = sbr.rel (%p418) target = $region68
      $region67: #{neumf_forward.1} parent=59 // pred_region
        %s421 = smul.u32 16, %s22
        %p422 = scmp.lt.s32.totalorder %s421, 31
        %s423 = scalar_select %p422, %s421, 31
        %s424 = smul.addr %s423, 4
        %s425 = scalar_lea.vmem %s1, %s424
        %s426 = smul.u32 16, %s22
      $region68: #{neumf_forward.1} parent=59 // pred_fallthru
        _
      // Predicated region
      $region69: #{neumf_forward.1} parent=59 // pred_check
        %p427 = pneg %p94
      $region70: #{neumf_forward.1} parent=59 // pred_check_branch
        %429 = sbr.rel (%p427) target = $region72
      $region71: #{neumf_forward.1} parent=59 // pred_region
        %s430 = smul.u32 16, %s22
        %p431 = scmp.lt.s32.totalorder %s430, 31
        %s432 = scalar_select %p431, %s430, 31
        %s433 = smul.addr %s432, 4
        %s434 = scalar_lea.vmem %s2, %s433
        %s435 = smul.u32 16, %s22
      $region72: #{neumf_forward.1} parent=59 // pred_fallthru
        _
    $region60: #{neumf_forward.1} parent=5 // pred_fallthru
      _
    %p436 = scmp.le.s32.totalorder 1, %s22
    %p437 = scmp.lt.s32.totalorder %s22, 3
    %p438 = pnand %p436, %p437
    %p439 = pneg %p438
    // Predicated region
    $region73: #{neumf_forward.1} parent=5 // pred_check
      _
    $region74: #{neumf_forward.1} parent=5 // pred_check_branch
      %441 = sbr.rel (%p438) target = $region76
    $region75: #{neumf_forward.1} parent=5 // pred_region
      %s442 = ssub.s32 %s22, 1
      %s443 = smul.u32 16, %s27
      %p444 = scmp.lt.s32.totalorder %s443, 31
      %s445 = scalar_select %p444, %s443, 31
      %s446 = smul.addr %s445, 4
      %s447 = scalar_lea.vmem %s0, %s446
      %p448 = pneg %p48
      %p449 = pneg %p45
      %s450 = smul.u32 16, %s27
      %p451 = scmp.lt.s32.totalorder %s450, 31
      %s452 = scalar_select %p451, %s450, 31
      %s453 = smul.addr %s452, 4
      %s454 = scalar_lea.vmem %s1, %s453
      %p455 = pneg %p74
      %p456 = pneg %p71
      %s457 = smul.u32 16, %s27
      %p458 = scmp.lt.s32.totalorder %s457, 31
      %s459 = scalar_select %p458, %s457, 31
      %s460 = smul.addr %s459, 4
      %s461 = scalar_lea.vmem %s2, %s460
      %p462 = pneg %p100
      %p463 = pneg %p97
      %p464 = pneg %p121
      %p465 = pneg %p118
      %p466 = pneg %p142
      %p467 = pneg %p139
      %p468 = pneg %p163
      %p469 = pneg %p160
      %p470 = pneg %p184
      %p471 = pneg %p181
      %p472 = pneg %p205
      %p473 = pneg %p202
      %p474 = pneg %p226
      %p475 = pneg %p223
      %p476 = pneg %p247
      %p477 = pneg %p244
      %p478 = pneg %p268
      %p479 = pneg %p265
      %p480 = pneg %p289
      %p481 = pneg %p286
      %p482 = pneg %p310
      %p483 = pneg %p307
      %p484 = pneg %p331
      %p485 = pneg %p328
      %p486 = pneg %p357
      %p487 = pneg %p354
      %s488 = smul.u32 16, %s27
      %p489 = scmp.lt.s32.totalorder %s488, 31
      %s490 = scalar_select %p489, %s488, 31
      %s491 = smul.addr %s490, 8
      %s492 = scalar_lea.vmem %s14, %s491
      %s493 = smul.u32 16, %s27
      %p494 = scmp.lt.s32.totalorder %s493, 31
      %s495 = scalar_select %p494, %s493, 31
      %s496 = smul.addr %s495, 4
      %s497 = scalar_lea.vmem %s0, %s496
      %s498 = smul.u32 16, %s27
      %s499 = smul.u32 16, %s27
      %p500 = scmp.lt.s32.totalorder %s499, 31
      %s501 = scalar_select %p500, %s499, 31
      %s502 = smul.addr %s501, 4
      %s503 = scalar_lea.vmem %s1, %s502
      %s504 = smul.u32 16, %s27
      %s505 = smul.u32 16, %s27
      %p506 = scmp.lt.s32.totalorder %s505, 31
      %s507 = scalar_select %p506, %s505, 31
      %s508 = smul.addr %s507, 4
      %s509 = scalar_lea.vmem %s2, %s508
      %s510 = smul.u32 16, %s27
      %s511 = smul.u32 16, %s27
      %p512 = scmp.lt.s32.totalorder %s511, 31
      %s513 = scalar_select %p512, %s511, 31
      %s514 = smul.addr %s513, 8
      %s515 = scalar_lea.vmem %s14, %s514
      %s516 = smul.u32 16, %s27
      %v518 = vld [vmem:[%s497] sm:$0xf]
      %v519 = vld [vmem:[%s497 + $0x4] sm:$0xf]
      %v520 = vld [vmem:[%s497 + $0x8] sm:$0xf]
      %v521 = vld [vmem:[%s497 + $0xc] sm:$0xf]
      %v522 = vld [vmem:[%s497 + $0x10] sm:$0xf]
      %v523 = vld [vmem:[%s497 + $0x14] sm:$0xf]
      %v524 = vld [vmem:[%s497 + $0x18] sm:$0xf]
      %v525 = vld [vmem:[%s497 + $0x1c] sm:$0xf]
      %v526 = vld [vmem:[%s497 + $0x20] sm:$0xf]
      %v527 = vld [vmem:[%s497 + $0x24] sm:$0xf]
      %v528 = vld [vmem:[%s497 + $0x28] sm:$0xf]
      %v529 = vld [vmem:[%s497 + $0x2c] sm:$0xf]
      %v530 = vld [vmem:[%s497 + $0x30] sm:$0xf]
      %v531 = vld [vmem:[%s497 + $0x34] sm:$0xf]
      %v532 = vld [vmem:[%s497 + $0x38] sm:$0xf]
      %v533 = vld [vmem:[%s497 + $0x3c] sm:$0xf]
      %v534 = vld [vmem:[%s3] sm:$0xf]
      %v535 = vld [vmem:[%s3 + $0x4] sm:$0xf]
      %v536 = vld [vmem:[%s3 + $0x8] sm:$0xf]
      %v537 = vld [vmem:[%s3 + $0xc] sm:$0xf]
      %v538 = vld [vmem:[%s4] sm:$0x1]
      %v540 = vperm.slane %v538, 0
      %v558 = vunpack.c.l.b16 %v518
      %v559 = vunpack.c.l.b16 %v519
      %v560 = vunpack.c.l.b16 %v520
      %v561 = vunpack.c.l.b16 %v521
      %v562 = vunpack.c.l.b16 %v522
      %v563 = vunpack.c.l.b16 %v523
      %v564 = vunpack.c.l.b16 %v524
      %v565 = vunpack.c.l.b16 %v525
      %v566 = vunpack.c.l.b16 %v526
      %v567 = vunpack.c.l.b16 %v527
      %v568 = vunpack.c.l.b16 %v528
      %v569 = vunpack.c.l.b16 %v529
      %v570 = vunpack.c.l.b16 %v530
      %v571 = vunpack.c.l.b16 %v531
      %v572 = vunpack.c.l.b16 %v532
      %v573 = vunpack.c.l.b16 %v533
      %v574 = vpack.c.b16 %v559, %v558
      %v575 = vpack.c.b16 %v561, %v560
      %v576 = vpack.c.b16 %v563, %v562
      %v577 = vpack.c.b16 %v565, %v564
      %v578 = vpack.c.b16 %v567, %v566
      %v579 = vpack.c.b16 %v569, %v568
      %v580 = vpack.c.b16 %v571, %v570
      %v581 = vpack.c.b16 %v573, %v572
      %v586 = vunpack.c.l.b16 %v534
      %v587 = vunpack.c.l.b16 %v535
      %v588 = vunpack.c.l.b16 %v536
      %v589 = vunpack.c.l.b16 %v537
      %v590 = vpack.c.b16 %v587, %v586
      %v591 = vpack.c.b16 %v589, %v588
      %vm594 = vcmask 261120
      %v596 = vsel %vm594, %v574, 0
      %v599 = vsel %vm594, %v575, 0
      %v602 = vsel %vm594, %v576, 0
      %v605 = vsel %vm594, %v577, 0
      %v608 = vsel %vm594, %v578, 0
      %v611 = vsel %vm594, %v579, 0
      %v614 = vsel %vm594, %v580, 0
      %v617 = vsel %vm594, %v581, 0
      %619 = vmatpush.bf16.msra.mxu0 0
      %620 = vmatpush.bf16.msra.mxu0 0
      %621 = vmatpush.bf16.msra.mxu0 0
      %622 = vmatpush.bf16.msra.mxu0 0
      %623 = vmatpush.bf16.msra.mxu0 0
      %624 = vmatpush.bf16.msra.mxu0 0
      %625 = vmatpush.bf16.msra.mxu0 %v591
      %626 = vmatpush.bf16.msra.mxu0 %v590
      %627 = vmatmul.bf16.gmra.mxu0 %v596
      %v628 = vpop.f32.mrf.mxu0
      %v629 = vadd.f32 %v540, %v628
      %v630 = vpop.f32.mrf.mxu0
      %v631 = vadd.f32 %v540, %v630
      %632 = vmatmul.bf16.gmra.mxu0 %v599
      %v633 = vpop.f32.mrf.mxu0
      %v634 = vadd.f32 %v540, %v633
      %v635 = vpop.f32.mrf.mxu0
      %v636 = vadd.f32 %v540, %v635
      %637 = vmatmul.bf16.gmra.mxu0 %v602
      %v638 = vpop.f32.mrf.mxu0
      %v639 = vadd.f32 %v540, %v638
      %v640 = vpop.f32.mrf.mxu0
      %v641 = vadd.f32 %v540, %v640
      %642 = vmatmul.bf16.gmra.mxu0 %v605
      %v643 = vpop.f32.mrf.mxu0
      %v644 = vadd.f32 %v540, %v643
      %v645 = vpop.f32.mrf.mxu0
      %v646 = vadd.f32 %v540, %v645
      %647 = vmatmul.bf16.gmra.mxu0 %v608
      %v648 = vpop.f32.mrf.mxu0
      %v649 = vadd.f32 %v540, %v648
      %v650 = vpop.f32.mrf.mxu0
      %v651 = vadd.f32 %v540, %v650
      %652 = vmatmul.bf16.gmra.mxu0 %v611
      %v653 = vpop.f32.mrf.mxu0
      %v654 = vadd.f32 %v540, %v653
      %v655 = vpop.f32.mrf.mxu0
      %v656 = vadd.f32 %v540, %v655
      %657 = vmatmul.bf16.gmra.mxu0 %v614
      %v658 = vpop.f32.mrf.mxu0
      %v659 = vadd.f32 %v540, %v658
      %v660 = vpop.f32.mrf.mxu0
      %v661 = vadd.f32 %v540, %v660
      %662 = vmatmul.bf16.gmra.mxu0 %v617
      %v663 = vpop.f32.mrf.mxu0
      %v664 = vadd.f32 %v540, %v663
      %v665 = vpop.f32.mrf.mxu0
      %v666 = vadd.f32 %v540, %v665
      %667 = vdwg.mxu0
      %v668 = vmax.f32 %v629, 0.0
      %v669 = vmax.f32 %v631, 0.0
      %v670 = vmax.f32 %v634, 0.0
      %v671 = vmax.f32 %v636, 0.0
      %v672 = vmax.f32 %v639, 0.0
      %v673 = vmax.f32 %v641, 0.0
      %v674 = vmax.f32 %v644, 0.0
      %v675 = vmax.f32 %v646, 0.0
      %v676 = vmax.f32 %v649, 0.0
      %v677 = vmax.f32 %v651, 0.0
      %v678 = vmax.f32 %v654, 0.0
      %v679 = vmax.f32 %v656, 0.0
      %v680 = vmax.f32 %v659, 0.0
      %v681 = vmax.f32 %v661, 0.0
      %v682 = vmax.f32 %v664, 0.0
      %v683 = vmax.f32 %v666, 0.0
      %v684 = vpack.c.bf16 %v669, %v668
      %v685 = vpack.c.bf16 %v671, %v670
      %v686 = vpack.c.bf16 %v673, %v672
      %v687 = vpack.c.bf16 %v675, %v674
      %v688 = vpack.c.bf16 %v677, %v676
      %v689 = vpack.c.bf16 %v679, %v678
      %v690 = vpack.c.bf16 %v681, %v680
      %v691 = vpack.c.bf16 %v683, %v682
      %v692 = vld [vmem:[%s5] sm:$0xf]
      %v693 = vld [vmem:[%s5 + $0x4] sm:$0xf]
      %v694 = vld [vmem:[%s5 + $0x8] sm:$0xf]
      %v695 = vld [vmem:[%s5 + $0xc] sm:$0xf]
      %v696 = vld [vmem:[%s6] sm:$0x1]
      %v698 = vperm.slane %v696, 0
      %v704 = vunpack.c.l.b16 %v692
      %v705 = vunpack.c.l.b16 %v693
      %v706 = vunpack.c.l.b16 %v694
      %v707 = vunpack.c.l.b16 %v695
      %v708 = vpack.c.b16 %v705, %v704
      %v709 = vpack.c.b16 %v707, %v706
      %v713 = vsel %vm594, %v684, 0
      %v716 = vsel %vm594, %v685, 0
      %v719 = vsel %vm594, %v686, 0
      %v722 = vsel %vm594, %v687, 0
      %v725 = vsel %vm594, %v688, 0
      %v728 = vsel %vm594, %v689, 0
      %v731 = vsel %vm594, %v690, 0
      %v734 = vsel %vm594, %v691, 0
      %736 = vmatpush.bf16.msra.mxu0 0
      %737 = vmatpush.bf16.msra.mxu0 0
      %738 = vmatpush.bf16.msra.mxu0 0
      %739 = vmatpush.bf16.msra.mxu0 0
      %740 = vmatpush.bf16.msra.mxu0 0
      %741 = vmatpush.bf16.msra.mxu0 0
      %742 = vmatpush.bf16.msra.mxu0 %v709
      %743 = vmatpush.bf16.msra.mxu0 %v708
      %744 = vmatmul.bf16.gmra.mxu0 %v713
      %v745 = vpop.f32.mrf.mxu0
      %v746 = vadd.f32 %v698, %v745
      %v747 = vpop.f32.mrf.mxu0
      %v748 = vadd.f32 %v698, %v747
      %749 = vmatmul.bf16.gmra.mxu0 %v716
      %v750 = vpop.f32.mrf.mxu0
      %v751 = vadd.f32 %v698, %v750
      %v752 = vpop.f32.mrf.mxu0
      %v753 = vadd.f32 %v698, %v752
      %754 = vmatmul.bf16.gmra.mxu0 %v719
      %v755 = vpop.f32.mrf.mxu0
      %v756 = vadd.f32 %v698, %v755
      %v757 = vpop.f32.mrf.mxu0
      %v758 = vadd.f32 %v698, %v757
      %759 = vmatmul.bf16.gmra.mxu0 %v722
      %v760 = vpop.f32.mrf.mxu0
      %v761 = vadd.f32 %v698, %v760
      %v762 = vpop.f32.mrf.mxu0
      %v763 = vadd.f32 %v698, %v762
      %764 = vmatmul.bf16.gmra.mxu0 %v725
      %v765 = vpop.f32.mrf.mxu0
      %v766 = vadd.f32 %v698, %v765
      %v767 = vpop.f32.mrf.mxu0
      %v768 = vadd.f32 %v698, %v767
      %769 = vmatmul.bf16.gmra.mxu0 %v728
      %v770 = vpop.f32.mrf.mxu0
      %v771 = vadd.f32 %v698, %v770
      %v772 = vpop.f32.mrf.mxu0
      %v773 = vadd.f32 %v698, %v772
      %774 = vmatmul.bf16.gmra.mxu0 %v731
      %v775 = vpop.f32.mrf.mxu0
      %v776 = vadd.f32 %v698, %v775
      %v777 = vpop.f32.mrf.mxu0
      %v778 = vadd.f32 %v698, %v777
      %779 = vmatmul.bf16.gmra.mxu0 %v734
      %v780 = vpop.f32.mrf.mxu0
      %v781 = vadd.f32 %v698, %v780
      %v782 = vpop.f32.mrf.mxu0
      %v783 = vadd.f32 %v698, %v782
      %784 = vdwg.mxu0
      %v785 = vmax.f32 %v746, 0.0
      %v786 = vmax.f32 %v748, 0.0
      %v787 = vmax.f32 %v751, 0.0
      %v788 = vmax.f32 %v753, 0.0
      %v789 = vmax.f32 %v756, 0.0
      %v790 = vmax.f32 %v758, 0.0
      %v791 = vmax.f32 %v761, 0.0
      %v792 = vmax.f32 %v763, 0.0
      %v793 = vmax.f32 %v766, 0.0
      %v794 = vmax.f32 %v768, 0.0
      %v795 = vmax.f32 %v771, 0.0
      %v796 = vmax.f32 %v773, 0.0
      %v797 = vmax.f32 %v776, 0.0
      %v798 = vmax.f32 %v778, 0.0
      %v799 = vmax.f32 %v781, 0.0
      %v800 = vmax.f32 %v783, 0.0
      %v801 = vpack.c.bf16 %v786, %v785
      %v802 = vpack.c.bf16 %v788, %v787
      %v803 = vpack.c.bf16 %v790, %v789
      %v804 = vpack.c.bf16 %v792, %v791
      %v805 = vpack.c.bf16 %v794, %v793
      %v806 = vpack.c.bf16 %v796, %v795
      %v807 = vpack.c.bf16 %v798, %v797
      %v808 = vpack.c.bf16 %v800, %v799
      %v809 = vld [vmem:[%s7] sm:$0xf]
      %v810 = vld [vmem:[%s7 + $0x4] sm:$0xf]
      %v811 = vld [vmem:[%s8] sm:$0x1]
      %v813 = vperm.slane %v811, 0
      %v817 = vunpack.c.l.b16 %v809
      %v818 = vunpack.c.l.b16 %v810
      %v819 = vpack.c.b16 %v818, %v817
      %vm821 = vcmask 130048
      %v823 = vsel %vm821, %v801, 0
      %v826 = vsel %vm821, %v802, 0
      %v829 = vsel %vm821, %v803, 0
      %v832 = vsel %vm821, %v804, 0
      %v835 = vsel %vm821, %v805, 0
      %v838 = vsel %vm821, %v806, 0
      %v841 = vsel %vm821, %v807, 0
      %v844 = vsel %vm821, %v808, 0
      %846 = vmatpush.bf16.msra.mxu0 0
      %847 = vmatpush.bf16.msra.mxu0 0
      %848 = vmatpush.bf16.msra.mxu0 0
      %849 = vmatpush.bf16.msra.mxu0 0
      %850 = vmatpush.bf16.msra.mxu0 0
      %851 = vmatpush.bf16.msra.mxu0 0
      %852 = vmatpush.bf16.msra.mxu0 0
      %853 = vmatpush.bf16.msra.mxu0 %v819
      %854 = vmatmul.bf16.gmra.mxu0 %v823
      %v855 = vpop.f32.mrf.mxu0
      %v856 = vadd.f32 %v813, %v855
      %v857 = vpop.f32.mrf.mxu0
      %v858 = vadd.f32 %v813, %v857
      %859 = vmatmul.bf16.gmra.mxu0 %v826
      %v860 = vpop.f32.mrf.mxu0
      %v861 = vadd.f32 %v813, %v860
      %v862 = vpop.f32.mrf.mxu0
      %v863 = vadd.f32 %v813, %v862
      %864 = vmatmul.bf16.gmra.mxu0 %v829
      %v865 = vpop.f32.mrf.mxu0
      %v866 = vadd.f32 %v813, %v865
      %v867 = vpop.f32.mrf.mxu0
      %v868 = vadd.f32 %v813, %v867
      %869 = vmatmul.bf16.gmra.mxu0 %v832
      %v870 = vpop.f32.mrf.mxu0
      %v871 = vadd.f32 %v813, %v870
      %v872 = vpop.f32.mrf.mxu0
      %v873 = vadd.f32 %v813, %v872
      %874 = vmatmul.bf16.gmra.mxu0 %v835
      %v875 = vpop.f32.mrf.mxu0
      %v876 = vadd.f32 %v813, %v875
      %v877 = vpop.f32.mrf.mxu0
      %v878 = vadd.f32 %v813, %v877
      %879 = vmatmul.bf16.gmra.mxu0 %v838
      %v880 = vpop.f32.mrf.mxu0
      %v881 = vadd.f32 %v813, %v880
      %v882 = vpop.f32.mrf.mxu0
      %v883 = vadd.f32 %v813, %v882
      %884 = vmatmul.bf16.gmra.mxu0 %v841
      %v885 = vpop.f32.mrf.mxu0
      %v886 = vadd.f32 %v813, %v885
      %v887 = vpop.f32.mrf.mxu0
      %v888 = vadd.f32 %v813, %v887
      %889 = vmatmul.bf16.gmra.mxu0 %v844
      %v890 = vpop.f32.mrf.mxu0
      %v891 = vadd.f32 %v813, %v890
      %v892 = vpop.f32.mrf.mxu0
      %v893 = vadd.f32 %v813, %v892
      %894 = vdwg.mxu0
      %v895 = vmax.f32 %v856, 0.0
      %v896 = vmax.f32 %v858, 0.0
      %v897 = vmax.f32 %v861, 0.0
      %v898 = vmax.f32 %v863, 0.0
      %v899 = vmax.f32 %v866, 0.0
      %v900 = vmax.f32 %v868, 0.0
      %v901 = vmax.f32 %v871, 0.0
      %v902 = vmax.f32 %v873, 0.0
      %v903 = vmax.f32 %v876, 0.0
      %v904 = vmax.f32 %v878, 0.0
      %v905 = vmax.f32 %v881, 0.0
      %v906 = vmax.f32 %v883, 0.0
      %v907 = vmax.f32 %v886, 0.0
      %v908 = vmax.f32 %v888, 0.0
      %v909 = vmax.f32 %v891, 0.0
      %v910 = vmax.f32 %v893, 0.0
      %v911 = vpack.c.bf16 %v896, %v895
      %v912 = vpack.c.bf16 %v898, %v897
      %v913 = vpack.c.bf16 %v900, %v899
      %v914 = vpack.c.bf16 %v902, %v901
      %v915 = vpack.c.bf16 %v904, %v903
      %v916 = vpack.c.bf16 %v906, %v905
      %v917 = vpack.c.bf16 %v908, %v907
      %v918 = vpack.c.bf16 %v910, %v909
      %v919 = vld [vmem:[%s9] sm:$0xf]
      %v920 = vld [vmem:[%s10] sm:$0x1]
      %v922 = vperm.slane %v920, 0
      %vm924 = vcmask 64512
      %v926 = vsel %vm924, %v911, 0
      %v929 = vsel %vm924, %v912, 0
      %v932 = vsel %vm924, %v913, 0
      %v935 = vsel %vm924, %v914, 0
      %v938 = vsel %vm924, %v915, 0
      %v941 = vsel %vm924, %v916, 0
      %v944 = vsel %vm924, %v917, 0
      %v947 = vsel %vm924, %v918, 0
      %vm949 = vcmask 1043456
      %v951 = vsel %vm949, %v919, 0
      %953 = vmatpush.bf16.msra.mxu0 0
      %954 = vmatpush.bf16.msra.mxu0 0
      %955 = vmatpush.bf16.msra.mxu0 0
      %956 = vmatpush.bf16.msra.mxu0 0
      %957 = vmatpush.bf16.msra.mxu0 0
      %958 = vmatpush.bf16.msra.mxu0 0
      %959 = vmatpush.bf16.msra.mxu0 0
      %960 = vmatpush.bf16.msra.mxu0 %v951
      %961 = vmatmul.bf16.gmra.mxu0 %v926
      %v962 = vpop.f32.mrf.mxu0
      %v963 = vadd.f32 %v922, %v962
      %v964 = vpop.f32.mrf.mxu0
      %v965 = vadd.f32 %v922, %v964
      %966 = vmatmul.bf16.gmra.mxu0 %v929
      %v967 = vpop.f32.mrf.mxu0
      %v968 = vadd.f32 %v922, %v967
      %v969 = vpop.f32.mrf.mxu0
      %v970 = vadd.f32 %v922, %v969
      %971 = vmatmul.bf16.gmra.mxu0 %v932
      %v972 = vpop.f32.mrf.mxu0
      %v973 = vadd.f32 %v922, %v972
      %v974 = vpop.f32.mrf.mxu0
      %v975 = vadd.f32 %v922, %v974
      %976 = vmatmul.bf16.gmra.mxu0 %v935
      %v977 = vpop.f32.mrf.mxu0
      %v978 = vadd.f32 %v922, %v977
      %v979 = vpop.f32.mrf.mxu0
      %v980 = vadd.f32 %v922, %v979
      %981 = vmatmul.bf16.gmra.mxu0 %v938
      %v982 = vpop.f32.mrf.mxu0
      %v983 = vadd.f32 %v922, %v982
      %v984 = vpop.f32.mrf.mxu0
      %v985 = vadd.f32 %v922, %v984
      %986 = vmatmul.bf16.gmra.mxu0 %v941
      %v987 = vpop.f32.mrf.mxu0
      %v988 = vadd.f32 %v922, %v987
      %v989 = vpop.f32.mrf.mxu0
      %v990 = vadd.f32 %v922, %v989
      %991 = vmatmul.bf16.gmra.mxu0 %v944
      %v992 = vpop.f32.mrf.mxu0
      %v993 = vadd.f32 %v922, %v992
      %v994 = vpop.f32.mrf.mxu0
      %v995 = vadd.f32 %v922, %v994
      %996 = vmatmul.bf16.gmra.mxu0 %v947
      %v997 = vpop.f32.mrf.mxu0
      %v998 = vadd.f32 %v922, %v997
      %v999 = vpop.f32.mrf.mxu0
      %v1000 = vadd.f32 %v922, %v999
      %1001 = vdwg.mxu0
      %v1002 = vmax.f32 %v963, 0.0
      %v1003 = vmax.f32 %v965, 0.0
      %v1004 = vmax.f32 %v968, 0.0
      %v1005 = vmax.f32 %v970, 0.0
      %v1006 = vmax.f32 %v973, 0.0
      %v1007 = vmax.f32 %v975, 0.0
      %v1008 = vmax.f32 %v978, 0.0
      %v1009 = vmax.f32 %v980, 0.0
      %v1010 = vmax.f32 %v983, 0.0
      %v1011 = vmax.f32 %v985, 0.0
      %v1012 = vmax.f32 %v988, 0.0
      %v1013 = vmax.f32 %v990, 0.0
      %v1014 = vmax.f32 %v993, 0.0
      %v1015 = vmax.f32 %v995, 0.0
      %v1016 = vmax.f32 %v998, 0.0
      %v1017 = vmax.f32 %v1000, 0.0
      %v1018 = vld [vmem:[%s503] sm:$0xf]
      %v1019 = vld [vmem:[%s503 + $0x4] sm:$0xf]
      %v1020 = vld [vmem:[%s503 + $0x8] sm:$0xf]
      %v1021 = vld [vmem:[%s503 + $0xc] sm:$0xf]
      %v1022 = vld [vmem:[%s503 + $0x10] sm:$0xf]
      %v1023 = vld [vmem:[%s503 + $0x14] sm:$0xf]
      %v1024 = vld [vmem:[%s503 + $0x18] sm:$0xf]
      %v1025 = vld [vmem:[%s503 + $0x1c] sm:$0xf]
      %v1026 = vld [vmem:[%s503 + $0x20] sm:$0xf]
      %v1027 = vld [vmem:[%s503 + $0x24] sm:$0xf]
      %v1028 = vld [vmem:[%s503 + $0x28] sm:$0xf]
      %v1029 = vld [vmem:[%s503 + $0x2c] sm:$0xf]
      %v1030 = vld [vmem:[%s503 + $0x30] sm:$0xf]
      %v1031 = vld [vmem:[%s503 + $0x34] sm:$0xf]
      %v1032 = vld [vmem:[%s503 + $0x38] sm:$0xf]
      %v1033 = vld [vmem:[%s503 + $0x3c] sm:$0xf]
      %v1034 = vld [vmem:[%s509] sm:$0xf]
      %v1035 = vld [vmem:[%s509 + $0x4] sm:$0xf]
      %v1036 = vld [vmem:[%s509 + $0x8] sm:$0xf]
      %v1037 = vld [vmem:[%s509 + $0xc] sm:$0xf]
      %v1038 = vld [vmem:[%s509 + $0x10] sm:$0xf]
      %v1039 = vld [vmem:[%s509 + $0x14] sm:$0xf]
      %v1040 = vld [vmem:[%s509 + $0x18] sm:$0xf]
      %v1041 = vld [vmem:[%s509 + $0x1c] sm:$0xf]
      %v1042 = vld [vmem:[%s509 + $0x20] sm:$0xf]
      %v1043 = vld [vmem:[%s509 + $0x24] sm:$0xf]
      %v1044 = vld [vmem:[%s509 + $0x28] sm:$0xf]
      %v1045 = vld [vmem:[%s509 + $0x2c] sm:$0xf]
      %v1046 = vld [vmem:[%s509 + $0x30] sm:$0xf]
      %v1047 = vld [vmem:[%s509 + $0x34] sm:$0xf]
      %v1048 = vld [vmem:[%s509 + $0x38] sm:$0xf]
      %v1049 = vld [vmem:[%s509 + $0x3c] sm:$0xf]
      %v1050 = vunpack.c.l.bf16 %v1018
      %v1051 = vunpack.c.l.bf16 %v1019
      %v1052 = vunpack.c.l.bf16 %v1020
      %v1053 = vunpack.c.l.bf16 %v1021
      %v1054 = vunpack.c.l.bf16 %v1022
      %v1055 = vunpack.c.l.bf16 %v1023
      %v1056 = vunpack.c.l.bf16 %v1024
      %v1057 = vunpack.c.l.bf16 %v1025
      %v1058 = vunpack.c.l.bf16 %v1026
      %v1059 = vunpack.c.l.bf16 %v1027
      %v1060 = vunpack.c.l.bf16 %v1028
      %v1061 = vunpack.c.l.bf16 %v1029
      %v1062 = vunpack.c.l.bf16 %v1030
      %v1063 = vunpack.c.l.bf16 %v1031
      %v1064 = vunpack.c.l.bf16 %v1032
      %v1065 = vunpack.c.l.bf16 %v1033
      %v1066 = vunpack.c.l.bf16 %v1034
      %v1067 = vunpack.c.l.bf16 %v1035
      %v1068 = vunpack.c.l.bf16 %v1036
      %v1069 = vunpack.c.l.bf16 %v1037
      %v1070 = vunpack.c.l.bf16 %v1038
      %v1071 = vunpack.c.l.bf16 %v1039
      %v1072 = vunpack.c.l.bf16 %v1040
      %v1073 = vunpack.c.l.bf16 %v1041
      %v1074 = vunpack.c.l.bf16 %v1042
      %v1075 = vunpack.c.l.bf16 %v1043
      %v1076 = vunpack.c.l.bf16 %v1044
      %v1077 = vunpack.c.l.bf16 %v1045
      %v1078 = vunpack.c.l.bf16 %v1046
      %v1079 = vunpack.c.l.bf16 %v1047
      %v1080 = vunpack.c.l.bf16 %v1048
      %v1081 = vunpack.c.l.bf16 %v1049
      %v1082 = vmul.f32 %v1050, %v1066
      %v1083 = vmul.f32 %v1051, %v1067
      %v1084 = vmul.f32 %v1052, %v1068
      %v1085 = vmul.f32 %v1053, %v1069
      %v1086 = vmul.f32 %v1054, %v1070
      %v1087 = vmul.f32 %v1055, %v1071
      %v1088 = vmul.f32 %v1056, %v1072
      %v1089 = vmul.f32 %v1057, %v1073
      %v1090 = vmul.f32 %v1058, %v1074
      %v1091 = vmul.f32 %v1059, %v1075
      %v1092 = vmul.f32 %v1060, %v1076
      %v1093 = vmul.f32 %v1061, %v1077
      %v1094 = vmul.f32 %v1062, %v1078
      %v1095 = vmul.f32 %v1063, %v1079
      %v1096 = vmul.f32 %v1064, %v1080
      %v1097 = vmul.f32 %v1065, %v1081
      %v1098 = vpack.c.bf16 %v1083, %v1082
      %v1099 = vpack.c.bf16 %v1085, %v1084
      %v1100 = vpack.c.bf16 %v1087, %v1086
      %v1101 = vpack.c.bf16 %v1089, %v1088
      %v1102 = vpack.c.bf16 %v1091, %v1090
      %v1103 = vpack.c.bf16 %v1093, %v1092
      %v1104 = vpack.c.bf16 %v1095, %v1094
      %v1105 = vpack.c.bf16 %v1097, %v1096
      %v1106 = vpack.c.bf16 %v1003, %v1002
      %v1107 = vpack.c.bf16 %v1005, %v1004
      %v1108 = vpack.c.bf16 %v1007, %v1006
      %v1109 = vpack.c.bf16 %v1009, %v1008
      %v1110 = vpack.c.bf16 %v1011, %v1010
      %v1111 = vpack.c.bf16 %v1013, %v1012
      %v1112 = vpack.c.bf16 %v1015, %v1014
      %v1113 = vpack.c.bf16 %v1017, %v1016
      %v1114 = vld [vmem:[%s11] sm:$0xf]
      %v1115 = vld [vmem:[%s12] sm:$0xf]
      %v1117 = vsel %vm924, %v1098, 0
      %v1120 = vsel %vm924, %v1099, 0
      %v1123 = vsel %vm924, %v1100, 0
      %v1126 = vsel %vm924, %v1101, 0
      %v1129 = vsel %vm924, %v1102, 0
      %v1132 = vsel %vm924, %v1103, 0
      %v1135 = vsel %vm924, %v1104, 0
      %v1138 = vsel %vm924, %v1105, 0
      %v1141 = vsel %vm949, %v1115, 0
      %1143 = vmatpush.bf16.msra.mxu0 0
      %1144 = vmatpush.bf16.msra.mxu0 0
      %1145 = vmatpush.bf16.msra.mxu0 0
      %1146 = vmatpush.bf16.msra.mxu0 0
      %1147 = vmatpush.bf16.msra.mxu0 0
      %1148 = vmatpush.bf16.msra.mxu0 0
      %1149 = vmatpush.bf16.msra.mxu0 0
      %1150 = vmatpush.bf16.msra.mxu0 %v1141
      %1151 = vmatmul.bf16.gmra.mxu0 %v1117
      %v1152 = vpop.f32.mrf.mxu0
      %v1153 = vadd.f32 0.0, %v1152
      %v1154 = vpop.f32.mrf.mxu0
      %v1155 = vadd.f32 0.0, %v1154
      %1156 = vmatmul.bf16.gmra.mxu0 %v1120
      %v1157 = vpop.f32.mrf.mxu0
      %v1158 = vadd.f32 0.0, %v1157
      %v1159 = vpop.f32.mrf.mxu0
      %v1160 = vadd.f32 0.0, %v1159
      %1161 = vmatmul.bf16.gmra.mxu0 %v1123
      %v1162 = vpop.f32.mrf.mxu0
      %v1163 = vadd.f32 0.0, %v1162
      %v1164 = vpop.f32.mrf.mxu0
      %v1165 = vadd.f32 0.0, %v1164
      %1166 = vmatmul.bf16.gmra.mxu0 %v1126
      %v1167 = vpop.f32.mrf.mxu0
      %v1168 = vadd.f32 0.0, %v1167
      %v1169 = vpop.f32.mrf.mxu0
      %v1170 = vadd.f32 0.0, %v1169
      %1171 = vmatmul.bf16.gmra.mxu0 %v1129
      %v1172 = vpop.f32.mrf.mxu0
      %v1173 = vadd.f32 0.0, %v1172
      %v1174 = vpop.f32.mrf.mxu0
      %v1175 = vadd.f32 0.0, %v1174
      %1176 = vmatmul.bf16.gmra.mxu0 %v1132
      %v1177 = vpop.f32.mrf.mxu0
      %v1178 = vadd.f32 0.0, %v1177
      %v1179 = vpop.f32.mrf.mxu0
      %v1180 = vadd.f32 0.0, %v1179
      %1181 = vmatmul.bf16.gmra.mxu0 %v1135
      %v1182 = vpop.f32.mrf.mxu0
      %v1183 = vadd.f32 0.0, %v1182
      %v1184 = vpop.f32.mrf.mxu0
      %v1185 = vadd.f32 0.0, %v1184
      %1186 = vmatmul.bf16.gmra.mxu0 %v1138
      %v1187 = vpop.f32.mrf.mxu0
      %v1188 = vadd.f32 0.0, %v1187
      %v1189 = vpop.f32.mrf.mxu0
      %v1190 = vadd.f32 0.0, %v1189
      %1191 = vdwg.mxu0
      %v1193 = vsel %vm924, %v1106, 0
      %v1196 = vsel %vm924, %v1107, 0
      %v1199 = vsel %vm924, %v1108, 0
      %v1202 = vsel %vm924, %v1109, 0
      %v1205 = vsel %vm924, %v1110, 0
      %v1208 = vsel %vm924, %v1111, 0
      %v1211 = vsel %vm924, %v1112, 0
      %v1214 = vsel %vm924, %v1113, 0
      %v1217 = vsel %vm949, %v1114, 0
      %1219 = vmatpush.bf16.msra.mxu0 0
      %1220 = vmatpush.bf16.msra.mxu0 0
      %1221 = vmatpush.bf16.msra.mxu0 0
      %1222 = vmatpush.bf16.msra.mxu0 0
      %1223 = vmatpush.bf16.msra.mxu0 0
      %1224 = vmatpush.bf16.msra.mxu0 0
      %1225 = vmatpush.bf16.msra.mxu0 0
      %1226 = vmatpush.bf16.msra.mxu0 %v1217
      %1227 = vmatmul.bf16.gmra.mxu0 %v1193
      %v1228 = vpop.f32.mrf.mxu0
      %v1229 = vadd.f32 %v1153, %v1228
      %v1230 = vpop.f32.mrf.mxu0
      %v1231 = vadd.f32 %v1155, %v1230
      %1232 = vmatmul.bf16.gmra.mxu0 %v1196
      %v1233 = vpop.f32.mrf.mxu0
      %v1234 = vadd.f32 %v1158, %v1233
      %v1235 = vpop.f32.mrf.mxu0
      %v1236 = vadd.f32 %v1160, %v1235
      %1237 = vmatmul.bf16.gmra.mxu0 %v1199
      %v1238 = vpop.f32.mrf.mxu0
      %v1239 = vadd.f32 %v1163, %v1238
      %v1240 = vpop.f32.mrf.mxu0
      %v1241 = vadd.f32 %v1165, %v1240
      %1242 = vmatmul.bf16.gmra.mxu0 %v1202
      %v1243 = vpop.f32.mrf.mxu0
      %v1244 = vadd.f32 %v1168, %v1243
      %v1245 = vpop.f32.mrf.mxu0
      %v1246 = vadd.f32 %v1170, %v1245
      %1247 = vmatmul.bf16.gmra.mxu0 %v1205
      %v1248 = vpop.f32.mrf.mxu0
      %v1249 = vadd.f32 %v1173, %v1248
      %v1250 = vpop.f32.mrf.mxu0
      %v1251 = vadd.f32 %v1175, %v1250
      %1252 = vmatmul.bf16.gmra.mxu0 %v1208
      %v1253 = vpop.f32.mrf.mxu0
      %v1254 = vadd.f32 %v1178, %v1253
      %v1255 = vpop.f32.mrf.mxu0
      %v1256 = vadd.f32 %v1180, %v1255
      %1257 = vmatmul.bf16.gmra.mxu0 %v1211
      %v1258 = vpop.f32.mrf.mxu0
      %v1259 = vadd.f32 %v1183, %v1258
      %v1260 = vpop.f32.mrf.mxu0
      %v1261 = vadd.f32 %v1185, %v1260
      %1262 = vmatmul.bf16.gmra.mxu0 %v1214
      %v1263 = vpop.f32.mrf.mxu0
      %v1264 = vadd.f32 %v1188, %v1263
      %v1265 = vpop.f32.mrf.mxu0
      %v1266 = vadd.f32 %v1190, %v1265
      %1267 = vdwg.mxu0
      %v1268 = vld [vmem:[#allocation2] sm:$0x1]
      %v1270 = vperm.slane %v1268, 0
      %v1272 = vadd.f32 %v1229, %v1270
      %v1273 = vadd.f32 %v1231, %v1270
      %v1274 = vadd.f32 %v1234, %v1270
      %v1275 = vadd.f32 %v1236, %v1270
      %v1276 = vadd.f32 %v1239, %v1270
      %v1277 = vadd.f32 %v1241, %v1270
      %v1278 = vadd.f32 %v1244, %v1270
      %v1279 = vadd.f32 %v1246, %v1270
      %v1280 = vadd.f32 %v1249, %v1270
      %v1281 = vadd.f32 %v1251, %v1270
      %v1282 = vadd.f32 %v1254, %v1270
      %v1283 = vadd.f32 %v1256, %v1270
      %v1284 = vadd.f32 %v1259, %v1270
      %v1285 = vadd.f32 %v1261, %v1270
      %v1286 = vadd.f32 %v1264, %v1270
      %v1287 = vadd.f32 %v1266, %v1270
      %v1288 = vsub.f32 0.0, %v1272
      %v1289 = vsub.f32 0.0, %v1273
      %v1290 = vsub.f32 0.0, %v1274
      %v1291 = vsub.f32 0.0, %v1275
      %v1292 = vsub.f32 0.0, %v1276
      %v1293 = vsub.f32 0.0, %v1277
      %v1294 = vsub.f32 0.0, %v1278
      %v1295 = vsub.f32 0.0, %v1279
      %v1296 = vsub.f32 0.0, %v1280
      %v1297 = vsub.f32 0.0, %v1281
      %v1298 = vsub.f32 0.0, %v1282
      %v1299 = vsub.f32 0.0, %v1283
      %v1300 = vsub.f32 0.0, %v1284
      %v1301 = vsub.f32 0.0, %v1285
      %v1302 = vsub.f32 0.0, %v1286
      %v1303 = vsub.f32 0.0, %v1287
      %v1304 = vmul.f32 %v1288, 1.442695
      %v1305 = vpow.pop %v1304
      %v1306 = vmul.f32 %v1289, 1.442695
      %v1307 = vpow.pop %v1306
      %v1308 = vmul.f32 %v1290, 1.442695
      %v1309 = vpow.pop %v1308
      %v1310 = vmul.f32 %v1291, 1.442695
      %v1311 = vpow.pop %v1310
      %v1312 = vmul.f32 %v1292, 1.442695
      %v1313 = vpow.pop %v1312
      %v1314 = vmul.f32 %v1293, 1.442695
      %v1315 = vpow.pop %v1314
      %v1316 = vmul.f32 %v1294, 1.442695
      %v1317 = vpow.pop %v1316
      %v1318 = vmul.f32 %v1295, 1.442695
      %v1319 = vpow.pop %v1318
      %v1320 = vmul.f32 %v1296, 1.442695
      %v1321 = vpow.pop %v1320
      %v1322 = vmul.f32 %v1297, 1.442695
      %v1323 = vpow.pop %v1322
      %v1324 = vmul.f32 %v1298, 1.442695
      %v1325 = vpow.pop %v1324
      %v1326 = vmul.f32 %v1299, 1.442695
      %v1327 = vpow.pop %v1326
      %v1328 = vmul.f32 %v1300, 1.442695
      %v1329 = vpow.pop %v1328
      %v1330 = vmul.f32 %v1301, 1.442695
      %v1331 = vpow.pop %v1330
      %v1332 = vmul.f32 %v1302, 1.442695
      %v1333 = vpow.pop %v1332
      %v1334 = vmul.f32 %v1303, 1.442695
      %v1335 = vpow.pop %v1334
      %v1336 = vadd.f32 %v1305, 1.0
      %v1337 = vadd.f32 %v1307, 1.0
      %v1338 = vadd.f32 %v1309, 1.0
      %v1339 = vadd.f32 %v1311, 1.0
      %v1340 = vadd.f32 %v1313, 1.0
      %v1341 = vadd.f32 %v1315, 1.0
      %v1342 = vadd.f32 %v1317, 1.0
      %v1343 = vadd.f32 %v1319, 1.0
      %v1344 = vadd.f32 %v1321, 1.0
      %v1345 = vadd.f32 %v1323, 1.0
      %v1346 = vadd.f32 %v1325, 1.0
      %v1347 = vadd.f32 %v1327, 1.0
      %v1348 = vadd.f32 %v1329, 1.0
      %v1349 = vadd.f32 %v1331, 1.0
      %v1350 = vadd.f32 %v1333, 1.0
      %v1351 = vadd.f32 %v1335, 1.0
      %v1352 = vrcp.pop %v1336
      %v1353 = vrcp.pop %v1337
      %v1354 = vrcp.pop %v1338
      %v1355 = vrcp.pop %v1339
      %v1356 = vrcp.pop %v1340
      %v1357 = vrcp.pop %v1341
      %v1358 = vrcp.pop %v1342
      %v1359 = vrcp.pop %v1343
      %v1360 = vrcp.pop %v1344
      %v1361 = vrcp.pop %v1345
      %v1362 = vrcp.pop %v1346
      %v1363 = vrcp.pop %v1347
      %v1364 = vrcp.pop %v1348
      %v1365 = vrcp.pop %v1349
      %v1366 = vrcp.pop %v1350
      %v1367 = vrcp.pop %v1351
      %v1368 = vmul.f32 %v1352, 5.0
      %v1369 = vmul.f32 %v1353, 5.0
      %v1370 = vmul.f32 %v1354, 5.0
      %v1371 = vmul.f32 %v1355, 5.0
      %v1372 = vmul.f32 %v1356, 5.0
      %v1373 = vmul.f32 %v1357, 5.0
      %v1374 = vmul.f32 %v1358, 5.0
      %v1375 = vmul.f32 %v1359, 5.0
      %v1376 = vmul.f32 %v1360, 5.0
      %v1377 = vmul.f32 %v1361, 5.0
      %v1378 = vmul.f32 %v1362, 5.0
      %v1379 = vmul.f32 %v1363, 5.0
      %v1380 = vmul.f32 %v1364, 5.0
      %v1381 = vmul.f32 %v1365, 5.0
      %v1382 = vmul.f32 %v1366, 5.0
      %v1383 = vmul.f32 %v1367, 5.0
      %v1384 = vadd.f32 %v1368, 1.0
      %v1385 = vadd.f32 %v1369, 1.0
      %v1386 = vadd.f32 %v1370, 1.0
      %v1387 = vadd.f32 %v1371, 1.0
      %v1388 = vadd.f32 %v1372, 1.0
      %v1389 = vadd.f32 %v1373, 1.0
      %v1390 = vadd.f32 %v1374, 1.0
      %v1391 = vadd.f32 %v1375, 1.0
      %v1392 = vadd.f32 %v1376, 1.0
      %v1393 = vadd.f32 %v1377, 1.0
      %v1394 = vadd.f32 %v1378, 1.0
      %v1395 = vadd.f32 %v1379, 1.0
      %v1396 = vadd.f32 %v1380, 1.0
      %v1397 = vadd.f32 %v1381, 1.0
      %v1398 = vadd.f32 %v1382, 1.0
      %v1399 = vadd.f32 %v1383, 1.0
      %vm1400 = vcmask 7168
      %1401 = vst.msk [vmem:[%s515] sm:$0xff] %vm1400, %v1384
      %1402 = vst.msk [vmem:[%s515 + $0x8] sm:$0xff] %vm1400, %v1385
      %1403 = vst.msk [vmem:[%s515 + $0x10] sm:$0xff] %vm1400, %v1386
      %1404 = vst.msk [vmem:[%s515 + $0x18] sm:$0xff] %vm1400, %v1387
      %1405 = vst.msk [vmem:[%s515 + $0x20] sm:$0xff] %vm1400, %v1388
      %1406 = vst.msk [vmem:[%s515 + $0x28] sm:$0xff] %vm1400, %v1389
      %1407 = vst.msk [vmem:[%s515 + $0x30] sm:$0xff] %vm1400, %v1390
      %1408 = vst.msk [vmem:[%s515 + $0x38] sm:$0xff] %vm1400, %v1391
      %1409 = vst.msk [vmem:[%s515 + $0x40] sm:$0xff] %vm1400, %v1392
      %1410 = vst.msk [vmem:[%s515 + $0x48] sm:$0xff] %vm1400, %v1393
      %1411 = vst.msk [vmem:[%s515 + $0x50] sm:$0xff] %vm1400, %v1394
      %1412 = vst.msk [vmem:[%s515 + $0x58] sm:$0xff] %vm1400, %v1395
      %1413 = vst.msk [vmem:[%s515 + $0x60] sm:$0xff] %vm1400, %v1396
      %1414 = vst.msk [vmem:[%s515 + $0x68] sm:$0xff] %vm1400, %v1397
      %1415 = vst.msk [vmem:[%s515 + $0x70] sm:$0xff] %vm1400, %v1398
      %1416 = vst.msk [vmem:[%s515 + $0x78] sm:$0xff] %vm1400, %v1399
      %s1417 = smul.u32 16, %s27
      %p1418 = scmp.lt.s32.totalorder %s1417, 31
      %s1419 = scalar_select %p1418, %s1417, 31
      %s1420 = smul.addr %s1419, 8
      %s1421 = scalar_lea.vmem %s14, %s1420
      // Predicated region
      $region77: #{neumf_forward.1} parent=75 // pred_check
        %p1422 = pneg %p354
      $region78: #{neumf_forward.1} parent=75 // pred_check_branch
        %1424 = sbr.rel (%p1422) target = $region80
      $region79: #{neumf_forward.1} parent=75 // pred_region
        %s1425 = smul.u32 16, %s27
      $region80: #{neumf_forward.1} parent=75 // pred_fallthru
        _
    $region76: #{neumf_forward.1} parent=5 // pred_fallthru
      _
    %p1426 = scmp.le.s32.totalorder 2, %s22
    // Predicated region
    $region81: #{neumf_forward.1} parent=5 // pred_check
      %p1427 = pneg %p1426
    $region82: #{neumf_forward.1} parent=5 // pred_check_branch
      %1429 = sbr.rel (%p1427) target = $region84
    $region83: #{neumf_forward.1} parent=5 // pred_region
      %s1430 = ssub.s32 %s22, 2
      // Predicated region
      $region85: #{neumf_forward.1} parent=83 // pred_check
        %p1431 = pneg %p360
      $region86: #{neumf_forward.1} parent=83 // pred_check_branch
        %1433 = sbr.rel (%p1431) target = $region88
      $region87: #{neumf_forward.1} parent=83 // pred_region
        %s1434 = smul.u32 16, %s28
        %p1435 = scmp.lt.s32.totalorder %s1434, 31
        %s1436 = scalar_select %p1435, %s1434, 31
        %s1437 = smul.addr %s1436, 8
        %s1438 = scalar_lea.vmem %s14, %s1437
      $region88: #{neumf_forward.1} parent=83 // pred_fallthru
        _
    $region84: #{neumf_forward.1} parent=5 // pred_fallthru
      _
  $region6: #{neumf_forward.1} parent=0 // loop_footer
    %s26 = sadd.s32 1, %s22
  $region7: #{neumf_forward.1} parent=0 // loop_footer_branch
    %21 = sbr.rel target = $region3
  $region8: #{neumf_forward.1} parent=0 // loop_exit
    _

</llo_original>
